<compile_context>
chip_gen: v6e
topology: v6e:2x2x1
jax: 0.10.0
libtpu: 0.0.40
codegen_flags: <defaults>
</compile_context>

<pallas_src>
import functools
import math

import jax
import jax.numpy as jnp
from jax.experimental import pallas as pl
from jax.experimental.pallas import tpu as pltpu

# --- synthetic small config (real dbmdz/bert-base-french has H=768, L=12, nH=12) ---
VOCAB = 100
HIDDEN = 32
N_LAYERS = 2
N_HEADS = 4
HEAD_DIM = HIDDEN // N_HEADS
INTERMEDIATE = 64
MAX_POS = 16
TYPE_VOCAB = 2
N_CLASSES = 3
CLS_PAD = 128           # classifier output padded to a lane-dense 128 columns
LN_EPS = 1e-12


# --------------------------- in-kernel helpers --------------------------------

def _layernorm(x, g, b):
    # f32 statistics, eps=1e-12 (HF BERT).
    mu = jnp.mean(x, axis=-1, keepdims=True)
    var = jnp.mean(jnp.square(x - mu), axis=-1, keepdims=True)
    return (x - mu) * jax.lax.rsqrt(var + LN_EPS) * g + b


def _dot_f32(a, b):
    # bf16 (or f32) MXU operands, f32 accumulation.
    return jnp.dot(a, b, preferred_element_type=jnp.float32)


# ----------------------------- Pallas kernels ---------------------------------

def _embed_ln_kernel(we_ref, pe_ref, te_ref, g_ref, b_ref, o_ref):
    # word (1,S,H) + position (S,H) + token_type row (1,H), then LayerNorm.
    x = we_ref[0] + pe_ref[...] + te_ref[...]
    o_ref[0] = _layernorm(x, g_ref[...], b_ref[...]).astype(o_ref.dtype)


def _encoder_layer_kernel(x_ref, mask_ref,
                          wqkv_ref, bqkv_ref, wo_ref, bo_ref,
                          ln1g_ref, ln1b_ref,
                          wi_ref, bi_ref, wo2_ref, bo2_ref,
                          ln2g_ref, ln2b_ref,
                          o_ref, ctx_ref, *, n_heads, head_dim):
    x = x_ref[0]                                  # (S, H) bf16, resident in VMEM
    S = x.shape[0]
    hidden = n_heads * head_dim

    # --- fused QKV projection: x read once, one wide bf16 MXU pass, f32 acc ---
    # (1/sqrt(head_dim) is pre-folded into the Q third of wqkv/bqkv.)
    qkv = _dot_f32(x, wqkv_ref[...]) + bqkv_ref[...]          # (S, 3H) f32

    # additive mask broadcast hoisted out of the per-head loop (no CSE for it)
    bias = jnp.broadcast_to(mask_ref[0], (S, S))              # (S, S) f32

    # cast Q/K/V slabs to bf16 once per layer (not once per head)
    q_all = qkv[:, 0:hidden].astype(jnp.bfloat16)
    k_all = qkv[:, hidden:2 * hidden].astype(jnp.bfloat16)
    v_all = qkv[:, 2 * hidden:3 * hidden].astype(jnp.bfloat16)

    # q @ k^T without materializing k^T: contract last dim of both operands.
    dn_nt = (((1,), (1,)), ((), ()))

    # --- per-head scaled-dot-product attention (heads statically unrolled) ---
    for h in range(n_heads):
        lo = h * head_dim
        qh = q_all[:, lo:lo + head_dim]                       # (S, Dh) bf16
        kh = k_all[:, lo:lo + head_dim]
        vh = v_all[:, lo:lo + head_dim]
        s = jax.lax.dot_general(qh, kh, dn_nt,
                                preferred_element_type=jnp.float32) + bias
        s = s - jnp.max(s, axis=-1, keepdims=True)
        p = jnp.exp(s)                                        # f32 softmax
        p = p * pl.reciprocal(jnp.sum(p, axis=-1, keepdims=True), approx=True)
        # write this head's context straight into the VMEM scratch (no concat)
        ctx_ref[:, lo:lo + head_dim] = _dot_f32(
            p.astype(jnp.bfloat16), vh).astype(jnp.bfloat16)

    ctx = ctx_ref[...]                                        # (S, H) bf16

    # --- output projection + (dropout=identity) residual + LayerNorm ---
    attn_out = _dot_f32(ctx, wo_ref[...]) + bo_ref[...]
    h1 = _layernorm(attn_out + x.astype(jnp.float32),
                    ln1g_ref[...], ln1b_ref[...])             # (S, H) f32

    # --- FFN (GELU) + residual + LayerNorm ---
    # TODO(synk): HF BERT uses exact erf-GELU; using tanh-approximate GELU here.
    inter = jax.nn.gelu(_dot_f32(h1.astype(jnp.bfloat16), wi_ref[...]) + bi_ref[...],
                        approximate=True)
    ffn_out = _dot_f32(inter.astype(jnp.bfloat16), wo2_ref[...]) + bo2_ref[...]
    o_ref[0] = _layernorm(ffn_out + h1,
                          ln2g_ref[...], ln2b_ref[...]).astype(o_ref.dtype)


def _pool_cls_kernel(cls_ref, wp_ref, bp_ref, wc_ref, bc_ref, o_ref):
    # pooler tanh(W_p @ h_CLS + b_p); dropout(p=0.3) is identity at inference;
    # classifier padded to 128 lane-dense output columns (zeros beyond n_classes).
    pooled = jnp.tanh(_dot_f32(cls_ref[...], wp_ref[...]) + bp_ref[...])
    o_ref[...] = _dot_f32(pooled.astype(jnp.bfloat16), wc_ref[...]) + bc_ref[...]


# ----------------------------- VMEM budgeting ---------------------------------

def _encoder_vmem_limit_bytes(S, H, I):
    # bf16 weights, single-buffered (pl.Buffered(1))
    w = 2 * (H * 3 * H + H * H + H * I + I * H)
    # f32 biases / LN params
    b = 4 * (3 * H + 6 * H + I)
    # bf16 activations in/out (double-buffered) + f32 mask row
    act_io = 2 * (2 * 2 * S * H) + 2 * 4 * S
    # f32 intermediates: qkv, scores+probs, FFN intermediate, LN temps; bf16 ctx scratch
    interm = 4 * (S * 3 * H + 2 * S * S + S * I + 4 * S * H) + 2 * S * H
    total = w + b + act_io + interm
    return int(min(max(2 * total, 16 * 2**20), 60 * 2**20))


# ----------------------------- Pallas wrappers --------------------------------

def pallas_embed_ln(word_gathered, pos_emb, type_row, gamma, beta):
    B, S, H = word_gathered.shape

    def const(*shape):
        n = len(shape)
        return pl.BlockSpec(shape, lambda b, n=n: (0,) * n,
                            pipeline_mode=pl.Buffered(1))

    return pl.pallas_call(
        _embed_ln_kernel,
        out_shape=jax.ShapeDtypeStruct((B, S, H), jnp.bfloat16),
        grid=(B,),
        in_specs=[
            pl.BlockSpec((1, S, H), lambda b: (b, 0, 0)),
            const(S, H),
            const(1, H),
            const(1, H),
            const(1, H),
        ],
        out_specs=pl.BlockSpec((1, S, H), lambda b: (b, 0, 0)),
        compiler_params=pltpu.CompilerParams(dimension_semantics=("parallel",)),
    )(word_gathered, pos_emb, type_row,
      gamma.reshape(1, H), beta.reshape(1, H))


def pallas_encoder_layer(x, mask_bias, lw):
    B, S, H = x.shape
    I = lw["wi"].shape[1]

    def wspec(*shape):
        # grid-invariant weight block: resident, single-buffered
        n = len(shape)
        return pl.BlockSpec(shape, lambda b, n=n: (0,) * n,
                            pipeline_mode=pl.Buffered(1))

    return pl.pallas_call(
        functools.partial(_encoder_layer_kernel,
                          n_heads=N_HEADS, head_dim=HEAD_DIM),
        out_shape=jax.ShapeDtypeStruct((B, S, H), jnp.bfloat16),
        grid=(B,),
        in_specs=[
            pl.BlockSpec((1, S, H), lambda b: (b, 0, 0)),     # x (bf16)
            pl.BlockSpec((1, 1, S), lambda b: (b, 0, 0)),     # additive mask bias (f32)
            wspec(H, 3 * H),                                  # wqkv (bf16, scale folded in Q)
            wspec(1, 3 * H),                                  # bqkv (f32)
            wspec(H, H),                                      # wo   (bf16)
            wspec(1, H),                                      # bo   (f32)
            wspec(1, H), wspec(1, H),                         # ln1 gamma/beta (f32)
            wspec(H, I),                                      # wi   (bf16)
            wspec(1, I),                                      # bi   (f32)
            wspec(I, H),                                      # wo2  (bf16)
            wspec(1, H),                                      # bo2  (f32)
            wspec(1, H), wspec(1, H),                         # ln2 gamma/beta (f32)
        ],
        out_specs=pl.BlockSpec((1, S, H), lambda b: (b, 0, 0)),
        scratch_shapes=[pltpu.VMEM((S, H), jnp.bfloat16)],    # per-head context scratch
        input_output_aliases={0: 0},                          # update x in place
        compiler_params=pltpu.CompilerParams(
            dimension_semantics=("parallel",),
            vmem_limit_bytes=_encoder_vmem_limit_bytes(S, H, I)),
    )(x, mask_bias,
      lw["wqkv"], lw["bqkv"], lw["wo"], lw["bo"],
      lw["ln1_g"], lw["ln1_b"],
      lw["wi"], lw["bi"], lw["wo2"], lw["bo2"],
      lw["ln2_g"], lw["ln2_b"])


def pallas_pool_classify(cls_tok, pooler_w, pooler_b, cls_w_pad, cls_b_pad):
    B, H = cls_tok.shape
    Np = cls_w_pad.shape[1]
    return pl.pallas_call(
        _pool_cls_kernel,
        out_shape=jax.ShapeDtypeStruct((B, Np), jnp.float32),
        grid=(1,),
        in_specs=[
            pl.BlockSpec((B, H), lambda i: (0, 0)),
            pl.BlockSpec((H, H), lambda i: (0, 0)),
            pl.BlockSpec((1, H), lambda i: (0, 0)),
            pl.BlockSpec((H, Np), lambda i: (0, 0)),
            pl.BlockSpec((1, Np), lambda i: (0, 0)),
        ],
        out_specs=pl.BlockSpec((B, Np), lambda i: (0, 0)),
    )(cls_tok, pooler_w, pooler_b, cls_w_pad, cls_b_pad)


# ------------------------------- parameters -----------------------------------

def init_params(key):
    """HF/PyTorch-like f32 parameters (stand-in for loading the checkpoint)."""
    keys = iter(jax.random.split(key, 12 * N_LAYERS + 16))

    def normal(shape):
        return (0.02 * jax.random.normal(next(keys), shape)).astype(jnp.float32)

    def zeros(shape):
        return jnp.zeros(shape, jnp.float32)

    def ones(shape):
        return jnp.ones(shape, jnp.float32)

    params = {
        "word_emb": normal((VOCAB, HIDDEN)),
        "pos_emb": normal((MAX_POS, HIDDEN)),
        "type_emb": normal((TYPE_VOCAB, HIDDEN)),
        "emb_ln_g": ones((HIDDEN,)),
        "emb_ln_b": zeros((HIDDEN,)),
        "layers": [],
        "pooler_w": normal((HIDDEN, HIDDEN)),
        "pooler_b": zeros((HIDDEN,)),
        "cls_w": normal((HIDDEN, N_CLASSES)),
        "cls_b": zeros((N_CLASSES,)),
    }
    for _ in range(N_LAYERS):
        params["layers"].append({
            "wq": normal((HIDDEN, HIDDEN)), "bq": zeros((HIDDEN,)),
            "wk": normal((HIDDEN, HIDDEN)), "bk": zeros((HIDDEN,)),
            "wv": normal((HIDDEN, HIDDEN)), "bv": zeros((HIDDEN,)),
            "wo": normal((HIDDEN, HIDDEN)), "bo": zeros((HIDDEN,)),
            "ln1_g": ones((HIDDEN,)), "ln1_b": zeros((HIDDEN,)),
            "wi": normal((HIDDEN, INTERMEDIATE)), "bi": zeros((INTERMEDIATE,)),
            "wo2": normal((INTERMEDIATE, HIDDEN)), "bo2": zeros((HIDDEN,)),
            "ln2_g": ones((HIDDEN,)), "ln2_b": zeros((HIDDEN,)),
        })
    return params


def prepare_inference_params(p):
    """Kernel-ready params: fused bf16 QKV (score scale folded into the Q third),
    bf16 large weights, f32 biases/LN params reshaped to (1, dim), lane-padded
    classifier."""
    H, I = HIDDEN, INTERMEDIATE
    scale = 1.0 / math.sqrt(HEAD_DIM)

    out = {
        "word_emb": p["word_emb"],
        "pos_emb": p["pos_emb"],
        "type_emb": p["type_emb"],
        "emb_ln_g": p["emb_ln_g"],
        "emb_ln_b": p["emb_ln_b"],
        "pooler_w": p["pooler_w"].astype(jnp.bfloat16),
        "pooler_b": p["pooler_b"].reshape(1, H),
        "layers": [],
    }
    cls_w_pad = jnp.pad(p["cls_w"], ((0, 0), (0, CLS_PAD - N_CLASSES)))
    cls_b_pad = jnp.pad(p["cls_b"], (0, CLS_PAD - N_CLASSES))
    out["cls_w_pad"] = cls_w_pad.astype(jnp.bfloat16)
    out["cls_b_pad"] = cls_b_pad.reshape(1, CLS_PAD)

    for lp in p["layers"]:
        # fold 1/sqrt(head_dim) into the Q projection (exactly equivalent to
        # scaling the attention scores), then fuse [Wq|Wk|Wv] and cast to bf16.
        wqkv = jnp.concatenate([lp["wq"] * scale, lp["wk"], lp["wv"]], axis=1)
        bqkv = jnp.concatenate([lp["bq"] * scale, lp["bk"], lp["bv"]])
        out["layers"].append({
            "wqkv": wqkv.astype(jnp.bfloat16),
            "bqkv": bqkv.reshape(1, 3 * H),
            "wo": lp["wo"].astype(jnp.bfloat16), "bo": lp["bo"].reshape(1, H),
            "ln1_g": lp["ln1_g"].reshape(1, H), "ln1_b": lp["ln1_b"].reshape(1, H),
            "wi": lp["wi"].astype(jnp.bfloat16), "bi": lp["bi"].reshape(1, I),
            "wo2": lp["wo2"].astype(jnp.bfloat16), "bo2": lp["bo2"].reshape(1, H),
            "ln2_g": lp["ln2_g"].reshape(1, H), "ln2_b": lp["ln2_b"].reshape(1, H),
        })
    return out


# ------------------------------- forward pass ----------------------------------

def forward(params, input_ids, attention_mask):
    B, S = input_ids.shape

    # Embedding-table gather stays in XLA (no clean Pallas equivalent);
    # position/token-type add + LayerNorm fused in one Pallas kernel (bf16 out).
    word = params["word_emb"][input_ids]                       # (B, S, H) f32
    x = pallas_embed_ln(word,
                        params["pos_emb"][:S],
                        params["type_emb"][0:1],               # token_type_ids = 0
                        params["emb_ln_g"], params["emb_ln_b"])  # (B, S, H) bf16

    # HF extended attention mask: (1 - mask) * -10000, shape (B, 1, S)
    mask_bias = ((1.0 - attention_mask.astype(jnp.float32)) * -10000.0
                 ).reshape(B, 1, S)

    # One fused Pallas kernel per encoder layer (QKV + SDPA + proj + LN + FFN + LN),
    # x aliased in place across layers.
    for lw in params["layers"]:
        x = pallas_encoder_layer(x, mask_bias, lw)

    # Pooler + dropout(identity) + classifier fused in one kernel.
    cls_tok = x[:, 0, :]                                       # (B, H) bf16
    logits_pad = pallas_pool_classify(cls_tok,
                                      params["pooler_w"], params["pooler_b"],
                                      params["cls_w_pad"], params["cls_b_pad"])
    return logits_pad[:, :N_CLASSES]                           # (B, n_classes) f32


# ----------------------------------- main ---------------------------------------

if __name__ == "__main__":
    B, S = 2, 8
    key = jax.random.PRNGKey(0)
    kp, kid = jax.random.split(key, 2)

    raw_params = init_params(kp)
    params = prepare_inference_params(raw_params)

    input_ids = jax.random.randint(kid, (B, S), 0, VOCAB, dtype=jnp.int32)
    attention_mask = jnp.ones((B, S), jnp.int32).at[:, 6:].set(0)  # last 2 tokens padded

    fwd = jax.jit(forward)
    logits = fwd(params, input_ids, attention_mask)
    logits = jax.block_until_ready(logits)

    assert logits.shape == (B, N_CLASSES), logits.shape
    assert logits.dtype == jnp.float32
    assert bool(jnp.all(jnp.isfinite(logits)))
    print("KERNEL_OK")
</pallas_src>

<mosaic_0001>
module attributes {stable_mosaic.version = 11 : i64} {
  func.func @_embed_ln_kernel(%arg0: i32, %arg1: memref<1x8x32xf32, #tpu.memory_space<vmem>>, %arg2: memref<8x32xf32, #tpu.memory_space<vmem>>, %arg3: memref<1x32xf32, #tpu.memory_space<vmem>>, %arg4: memref<1x32xf32, #tpu.memory_space<vmem>>, %arg5: memref<1x32xf32, #tpu.memory_space<vmem>>, %arg6: memref<1x8x32xbf16, #tpu.memory_space<vmem>>) attributes {dimension_semantics = [#tpu.dimension_semantics<parallel>], iteration_bounds = array<i64: 2>, scalar_prefetch = 0 : i64, scratch_operands = 0 : i64, tpu.core_type = #tpu.core_type<tc>, window_params = [{transform_indices = @transform_0, window_bounds = array<i64: 1, 8, 32>}, {pipeline_mode = #tpu.pipeline_mode<synchronous>, transform_indices = @transform_1, window_bounds = array<i64: 8, 32>}, {pipeline_mode = #tpu.pipeline_mode<synchronous>, transform_indices = @transform_2, window_bounds = array<i64: 1, 32>}, {pipeline_mode = #tpu.pipeline_mode<synchronous>, transform_indices = @transform_3, window_bounds = array<i64: 1, 32>}, {pipeline_mode = #tpu.pipeline_mode<synchronous>, transform_indices = @transform_4, window_bounds = array<i64: 1, 32>}, {transform_indices = @transform_5, window_bounds = array<i64: 1, 8, 32>}]} {
    %c0 = arith.constant 0 : index
    %c0_0 = arith.constant 0 : index
    %c0_1 = arith.constant 0 : index
    %0 = vector.load %arg1[%c0, %c0_0, %c0_1] : memref<1x8x32xf32, #tpu.memory_space<vmem>>, vector<1x8x32xf32>
    %1 = vector.shape_cast %0 : vector<1x8x32xf32> to vector<8x32xf32>
    %c0_2 = arith.constant 0 : index
    %c0_3 = arith.constant 0 : index
    %2 = vector.load %arg2[%c0_2, %c0_3] : memref<8x32xf32, #tpu.memory_space<vmem>>, vector<8x32xf32>
    %3 = arith.addf %1, %2 : vector<8x32xf32>
    %c0_4 = arith.constant 0 : index
    %c0_5 = arith.constant 0 : index
    %4 = vector.load %arg3[%c0_4, %c0_5] : memref<1x32xf32, #tpu.memory_space<vmem>>, vector<1x32xf32>
    %5 = vector.broadcast %4 : vector<1x32xf32> to vector<8x32xf32>
    %6 = arith.addf %3, %5 : vector<8x32xf32>
    %c0_6 = arith.constant 0 : index
    %c0_7 = arith.constant 0 : index
    %7 = vector.load %arg4[%c0_6, %c0_7] : memref<1x32xf32, #tpu.memory_space<vmem>>, vector<1x32xf32>
    %c0_8 = arith.constant 0 : index
    %c0_9 = arith.constant 0 : index
    %8 = vector.load %arg5[%c0_8, %c0_9] : memref<1x32xf32, #tpu.memory_space<vmem>>, vector<1x32xf32>
    %cst = arith.constant dense<0.000000e+00> : vector<8xf32>
    %9 = vector.multi_reduction <add>, %6, %cst [1] : vector<8x32xf32> to vector<8xf32>
    %10 = vector.shape_cast %9 : vector<8xf32> to vector<8x1xf32>
    %cst_10 = arith.constant 3.200000e+01 : f32
    %11 = vector.broadcast %cst_10 : f32 to vector<8x1xf32>
    %12 = arith.divf %10, %11 : vector<8x1xf32>
    %13 = vector.broadcast %12 : vector<8x1xf32> to vector<8x32xf32>
    %14 = arith.subf %6, %13 : vector<8x32xf32>
    %15 = arith.mulf %14, %14 : vector<8x32xf32>
    %cst_11 = arith.constant dense<0.000000e+00> : vector<8xf32>
    %16 = vector.multi_reduction <add>, %15, %cst_11 [1] : vector<8x32xf32> to vector<8xf32>
    %17 = vector.shape_cast %16 : vector<8xf32> to vector<8x1xf32>
    %cst_12 = arith.constant 3.200000e+01 : f32
    %18 = vector.broadcast %cst_12 : f32 to vector<8x1xf32>
    %19 = arith.divf %17, %18 : vector<8x1xf32>
    %20 = vector.broadcast %12 : vector<8x1xf32> to vector<8x32xf32>
    %21 = arith.subf %6, %20 : vector<8x32xf32>
    %cst_13 = arith.constant 9.99999996E-13 : f32
    %22 = vector.broadcast %cst_13 : f32 to vector<8x1xf32>
    %23 = arith.addf %19, %22 : vector<8x1xf32>
    %24 = math.rsqrt %23 : vector<8x1xf32>
    %25 = vector.broadcast %24 : vector<8x1xf32> to vector<8x32xf32>
    %26 = arith.mulf %21, %25 : vector<8x32xf32>
    %27 = vector.broadcast %7 : vector<1x32xf32> to vector<8x32xf32>
    %28 = arith.mulf %26, %27 : vector<8x32xf32>
    %29 = vector.broadcast %8 : vector<1x32xf32> to vector<8x32xf32>
    %30 = arith.addf %28, %29 : vector<8x32xf32>
    %31 = arith.truncf %30 : vector<8x32xf32> to vector<8x32xbf16>
    %c0_14 = arith.constant 0 : index
    %c0_15 = arith.constant 0 : index
    %c0_16 = arith.constant 0 : index
    %32 = vector.load %arg6[%c0_14, %c0_15, %c0_16] : memref<1x8x32xbf16, #tpu.memory_space<vmem>>, vector<1x8x32xbf16>
    %33 = vector.shape_cast %32 : vector<1x8x32xbf16> to vector<8x32xbf16>
    %34 = vector.shape_cast %31 : vector<8x32xbf16> to vector<1x8x32xbf16>
    tpu.vector_store %arg6[%c0_14, %c0_15, %c0_16], %34 {strides = array<i32>} : memref<1x8x32xbf16, #tpu.memory_space<vmem>>, vector<1x8x32xbf16>,
    return
  }
  func.func @transform_0(%arg0: i32) -> (i32, i32, i32) {
    %c0_i32 = arith.constant 0 : i32
    %c0_i32_0 = arith.constant 0 : i32
    %c0_i32_1 = arith.constant 0 : i32
    return %arg0, %c0_i32, %c0_i32_0 : i32, i32, i32
  }
  func.func @transform_1(%arg0: i32) -> (i32, i32) {
    %c0_i32 = arith.constant 0 : i32
    %c0_i32_0 = arith.constant 0 : i32
    %c0_i32_1 = arith.constant 0 : i32
    return %c0_i32, %c0_i32_0 : i32, i32
  }
  func.func @transform_2(%arg0: i32) -> (i32, i32) {
    %c0_i32 = arith.constant 0 : i32
    %c0_i32_0 = arith.constant 0 : i32
    %c0_i32_1 = arith.constant 0 : i32
    return %c0_i32, %c0_i32_0 : i32, i32
  }
  func.func @transform_3(%arg0: i32) -> (i32, i32) {
    %c0_i32 = arith.constant 0 : i32
    %c0_i32_0 = arith.constant 0 : i32
    %c0_i32_1 = arith.constant 0 : i32
    return %c0_i32, %c0_i32_0 : i32, i32
  }
  func.func @transform_4(%arg0: i32) -> (i32, i32) {
    %c0_i32 = arith.constant 0 : i32
    %c0_i32_0 = arith.constant 0 : i32
    %c0_i32_1 = arith.constant 0 : i32
    return %c0_i32, %c0_i32_0 : i32, i32
  }
  func.func @transform_5(%arg0: i32) -> (i32, i32, i32) {
    %c0_i32 = arith.constant 0 : i32
    %c0_i32_0 = arith.constant 0 : i32
    %c0_i32_1 = arith.constant 0 : i32
    return %arg0, %c0_i32, %c0_i32_0 : i32, i32, i32
  }
}

module attributes {stable_mosaic.version = 11 : i64} {
  func.func @_encoder_layer_kernel(%arg0: i32, %arg1: memref<1x8x32xbf16, #tpu.memory_space<vmem>>, %arg2: memref<1x1x8xf32, #tpu.memory_space<vmem>>, %arg3: memref<32x96xbf16, #tpu.memory_space<vmem>>, %arg4: memref<1x96xf32, #tpu.memory_space<vmem>>, %arg5: memref<32x32xbf16, #tpu.memory_space<vmem>>, %arg6: memref<1x32xf32, #tpu.memory_space<vmem>>, %arg7: memref<1x32xf32, #tpu.memory_space<vmem>>, %arg8: memref<1x32xf32, #tpu.memory_space<vmem>>, %arg9: memref<32x64xbf16, #tpu.memory_space<vmem>>, %arg10: memref<1x64xf32, #tpu.memory_space<vmem>>, %arg11: memref<64x32xbf16, #tpu.memory_space<vmem>>, %arg12: memref<1x32xf32, #tpu.memory_space<vmem>>, %arg13: memref<1x32xf32, #tpu.memory_space<vmem>>, %arg14: memref<1x32xf32, #tpu.memory_space<vmem>>, %arg15: memref<1x8x32xbf16, #tpu.memory_space<vmem>>, %arg16: memref<8x32xbf16, #tpu.memory_space<vmem>>) attributes {dimension_semantics = [#tpu.dimension_semantics<parallel>], iteration_bounds = array<i64: 2>, scalar_prefetch = 0 : i64, scratch_operands = 1 : i64, tpu.core_type = #tpu.core_type<tc>, window_params = [{transform_indices = @transform_0, window_bounds = array<i64: 1, 8, 32>}, {transform_indices = @transform_1, window_bounds = array<i64: 1, 1, 8>}, {pipeline_mode = #tpu.pipeline_mode<synchronous>, transform_indices = @transform_2, window_bounds = array<i64: 32, 96>}, {pipeline_mode = #tpu.pipeline_mode<synchronous>, transform_indices = @transform_3, window_bounds = array<i64: 1, 96>}, {pipeline_mode = #tpu.pipeline_mode<synchronous>, transform_indices = @transform_4, window_bounds = array<i64: 32, 32>}, {pipeline_mode = #tpu.pipeline_mode<synchronous>, transform_indices = @transform_5, window_bounds = array<i64: 1, 32>}, {pipeline_mode = #tpu.pipeline_mode<synchronous>, transform_indices = @transform_6, window_bounds = array<i64: 1, 32>}, {pipeline_mode = #tpu.pipeline_mode<synchronous>, transform_indices = @transform_7, window_bounds = array<i64: 1, 32>}, {pipeline_mode = #tpu.pipeline_mode<synchronous>, transform_indices = @transform_8, window_bounds = array<i64: 32, 64>}, {pipeline_mode = #tpu.pipeline_mode<synchronous>, transform_indices = @transform_9, window_bounds = array<i64: 1, 64>}, {pipeline_mode = #tpu.pipeline_mode<synchronous>, transform_indices = @transform_10, window_bounds = array<i64: 64, 32>}, {pipeline_mode = #tpu.pipeline_mode<synchronous>, transform_indices = @transform_11, window_bounds = array<i64: 1, 32>}, {pipeline_mode = #tpu.pipeline_mode<synchronous>, transform_indices = @transform_12, window_bounds = array<i64: 1, 32>}, {pipeline_mode = #tpu.pipeline_mode<synchronous>, transform_indices = @transform_13, window_bounds = array<i64: 1, 32>}, {transform_indices = @transform_14, window_bounds = array<i64: 1, 8, 32>}]} {
    %c0 = arith.constant 0 : index
    %c0_0 = arith.constant 0 : index
    %c0_1 = arith.constant 0 : index
    %0 = vector.load %arg1[%c0, %c0_0, %c0_1] : memref<1x8x32xbf16, #tpu.memory_space<vmem>>, vector<1x8x32xbf16>
    %1 = vector.shape_cast %0 : vector<1x8x32xbf16> to vector<8x32xbf16>
    %c0_2 = arith.constant 0 : index
    %c0_3 = arith.constant 0 : index
    %2 = vector.load %arg3[%c0_2, %c0_3] : memref<32x96xbf16, #tpu.memory_space<vmem>>, vector<32x96xbf16>
    %cst = arith.constant dense<0.000000e+00> : vector<8x96xf32>
    %3 = tpu.matmul %1, %2, %cst {dimension_numbers = #tpu.dot_dimension_numbers<[1], [0], [0], [1], [0, 0, 1, 1], [], []>} : vector<8x32xbf16>, vector<32x96xbf16>, vector<8x96xf32> -> vector<8x96xf32>
    %c0_4 = arith.constant 0 : index
    %c0_5 = arith.constant 0 : index
    %4 = vector.load %arg4[%c0_4, %c0_5] : memref<1x96xf32, #tpu.memory_space<vmem>>, vector<1x96xf32>
    %5 = vector.broadcast %4 : vector<1x96xf32> to vector<8x96xf32>
    %6 = arith.addf %3, %5 : vector<8x96xf32>
    %c0_6 = arith.constant 0 : index
    %c0_7 = arith.constant 0 : index
    %c0_8 = arith.constant 0 : index
    %7 = vector.load %arg2[%c0_6, %c0_7, %c0_8] : memref<1x1x8xf32, #tpu.memory_space<vmem>>, vector<1x1x8xf32>
    %8 = vector.shape_cast %7 : vector<1x1x8xf32> to vector<1x8xf32>
    %9 = vector.shape_cast %8 : vector<1x8xf32> to vector<1x8xf32>
    %10 = vector.broadcast %9 : vector<1x8xf32> to vector<8x8xf32>
    %11 = vector.extract_strided_slice %6 {offsets = [0, 0], sizes = [8, 32], strides = [1, 1]} : vector<8x96xf32> to vector<8x32xf32>
    %12 = arith.truncf %11 : vector<8x32xf32> to vector<8x32xbf16>
    %13 = vector.extract_strided_slice %6 {offsets = [0, 32], sizes = [8, 32], strides = [1, 1]} : vector<8x96xf32> to vector<8x32xf32>
    %14 = arith.truncf %13 : vector<8x32xf32> to vector<8x32xbf16>
    %15 = vector.extract_strided_slice %6 {offsets = [0, 64], sizes = [8, 32], strides = [1, 1]} : vector<8x96xf32> to vector<8x32xf32>
    %16 = arith.truncf %15 : vector<8x32xf32> to vector<8x32xbf16>
    %17 = vector.extract_strided_slice %12 {offsets = [0, 0], sizes = [8, 8], strides = [1, 1]} : vector<8x32xbf16> to vector<8x8xbf16>
    %18 = vector.extract_strided_slice %14 {offsets = [0, 0], sizes = [8, 8], strides = [1, 1]} : vector<8x32xbf16> to vector<8x8xbf16>
    %19 = vector.extract_strided_slice %16 {offsets = [0, 0], sizes = [8, 8], strides = [1, 1]} : vector<8x32xbf16> to vector<8x8xbf16>
    %cst_9 = arith.constant dense<0.000000e+00> : vector<8x8xf32>
    %20 = tpu.matmul %17, %18, %cst_9 {dimension_numbers = #tpu.dot_dimension_numbers<[1], [1], [0], [0], [0, 0, 1, 0], [], []>} : vector<8x8xbf16>, vector<8x8xbf16>, vector<8x8xf32> -> vector<8x8xf32>
    %21 = arith.addf %20, %10 : vector<8x8xf32>
    %cst_10 = arith.constant dense<0xFF800000> : vector<8xf32>
    %22 = vector.multi_reduction <maximumf>, %21, %cst_10 [1] : vector<8x8xf32> to vector<8xf32>
    %23 = vector.shape_cast %22 : vector<8xf32> to vector<8x1xf32>
    %24 = vector.broadcast %23 : vector<8x1xf32> to vector<8x8xf32>
    %25 = arith.subf %21, %24 : vector<8x8xf32>
    %26 = math.exp %25 : vector<8x8xf32>
    %cst_11 = arith.constant dense<0.000000e+00> : vector<8xf32>
    %27 = vector.multi_reduction <add>, %26, %cst_11 [1] : vector<8x8xf32> to vector<8xf32>
    %28 = vector.shape_cast %27 : vector<8xf32> to vector<8x1xf32>
    %29 = tpu.reciprocal %28 {approx = true} : vector<8x1xf32> -> vector<8x1xf32>
    %30 = vector.broadcast %29 : vector<8x1xf32> to vector<8x8xf32>
    %31 = arith.mulf %26, %30 : vector<8x8xf32>
    %32 = arith.truncf %31 : vector<8x8xf32> to vector<8x8xbf16>
    %cst_12 = arith.constant dense<0.000000e+00> : vector<8x8xf32>
    %33 = tpu.matmul %32, %19, %cst_12 {dimension_numbers = #tpu.dot_dimension_numbers<[1], [0], [0], [1], [0, 0, 1, 1], [], []>} : vector<8x8xbf16>, vector<8x8xbf16>, vector<8x8xf32> -> vector<8x8xf32>
    %34 = arith.truncf %33 : vector<8x8xf32> to vector<8x8xbf16>
    %c0_13 = arith.constant 0 : index
    %c0_14 = arith.constant 0 : index
    %35 = vector.load %arg16[%c0_13, %c0_14] : memref<8x32xbf16, #tpu.memory_space<vmem>>, vector<8x8xbf16>
    tpu.vector_store %arg16[%c0_13, %c0_14], %34 {strides = array<i32>} : memref<8x32xbf16, #tpu.memory_space<vmem>>, vector<8x8xbf16>,
    %36 = vector.extract_strided_slice %12 {offsets = [0, 8], sizes = [8, 8], strides = [1, 1]} : vector<8x32xbf16> to vector<8x8xbf16>
    %37 = vector.extract_strided_slice %14 {offsets = [0, 8], sizes = [8, 8], strides = [1, 1]} : vector<8x32xbf16> to vector<8x8xbf16>
    %38 = vector.extract_strided_slice %16 {offsets = [0, 8], sizes = [8, 8], strides = [1, 1]} : vector<8x32xbf16> to vector<8x8xbf16>
    %cst_15 = arith.constant dense<0.000000e+00> : vector<8x8xf32>
    %39 = tpu.matmul %36, %37, %cst_15 {dimension_numbers = #tpu.dot_dimension_numbers<[1], [1], [0], [0], [0, 0, 1, 0], [], []>} : vector<8x8xbf16>, vector<8x8xbf16>, vector<8x8xf32> -> vector<8x8xf32>
    %40 = arith.addf %39, %10 : vector<8x8xf32>
    %cst_16 = arith.constant dense<0xFF800000> : vector<8xf32>
    %41 = vector.multi_reduction <maximumf>, %40, %cst_16 [1] : vector<8x8xf32> to vector<8xf32>
    %42 = vector.shape_cast %41 : vector<8xf32> to vector<8x1xf32>
    %43 = vector.broadcast %42 : vector<8x1xf32> to vector<8x8xf32>
    %44 = arith.subf %40, %43 : vector<8x8xf32>
    %45 = math.exp %44 : vector<8x8xf32>
    %cst_17 = arith.constant dense<0.000000e+00> : vector<8xf32>
    %46 = vector.multi_reduction <add>, %45, %cst_17 [1] : vector<8x8xf32> to vector<8xf32>
    %47 = vector.shape_cast %46 : vector<8xf32> to vector<8x1xf32>
    %48 = tpu.reciprocal %47 {approx = true} : vector<8x1xf32> -> vector<8x1xf32>
    %49 = vector.broadcast %48 : vector<8x1xf32> to vector<8x8xf32>
    %50 = arith.mulf %45, %49 : vector<8x8xf32>
    %51 = arith.truncf %50 : vector<8x8xf32> to vector<8x8xbf16>
    %cst_18 = arith.constant dense<0.000000e+00> : vector<8x8xf32>
    %52 = tpu.matmul %51, %38, %cst_18 {dimension_numbers = #tpu.dot_dimension_numbers<[1], [0], [0], [1], [0, 0, 1, 1], [], []>} : vector<8x8xbf16>, vector<8x8xbf16>, vector<8x8xf32> -> vector<8x8xf32>
    %53 = arith.truncf %52 : vector<8x8xf32> to vector<8x8xbf16>
    %c0_19 = arith.constant 0 : index
    %c8 = arith.constant 8 : index
    %54 = vector.load %arg16[%c0_19, %c8] : memref<8x32xbf16, #tpu.memory_space<vmem>>, vector<8x8xbf16>
    tpu.vector_store %arg16[%c0_19, %c8], %53 {strides = array<i32>} : memref<8x32xbf16, #tpu.memory_space<vmem>>, vector<8x8xbf16>,
    %55 = vector.extract_strided_slice %12 {offsets = [0, 16], sizes = [8, 8], strides = [1, 1]} : vector<8x32xbf16> to vector<8x8xbf16>
    %56 = vector.extract_strided_slice %14 {offsets = [0, 16], sizes = [8, 8], strides = [1, 1]} : vector<8x32xbf16> to vector<8x8xbf16>
    %57 = vector.extract_strided_slice %16 {offsets = [0, 16], sizes = [8, 8], strides = [1, 1]} : vector<8x32xbf16> to vector<8x8xbf16>
    %cst_20 = arith.constant dense<0.000000e+00> : vector<8x8xf32>
    %58 = tpu.matmul %55, %56, %cst_20 {dimension_numbers = #tpu.dot_dimension_numbers<[1], [1], [0], [0], [0, 0, 1, 0], [], []>} : vector<8x8xbf16>, vector<8x8xbf16>, vector<8x8xf32> -> vector<8x8xf32>
    %59 = arith.addf %58, %10 : vector<8x8xf32>
    %cst_21 = arith.constant dense<0xFF800000> : vector<8xf32>
    %60 = vector.multi_reduction <maximumf>, %59, %cst_21 [1] : vector<8x8xf32> to vector<8xf32>
    %61 = vector.shape_cast %60 : vector<8xf32> to vector<8x1xf32>
    %62 = vector.broadcast %61 : vector<8x1xf32> to vector<8x8xf32>
    %63 = arith.subf %59, %62 : vector<8x8xf32>
    %64 = math.exp %63 : vector<8x8xf32>
    %cst_22 = arith.constant dense<0.000000e+00> : vector<8xf32>
    %65 = vector.multi_reduction <add>, %64, %cst_22 [1] : vector<8x8xf32> to vector<8xf32>
    %66 = vector.shape_cast %65 : vector<8xf32> to vector<8x1xf32>
    %67 = tpu.reciprocal %66 {approx = true} : vector<8x1xf32> -> vector<8x1xf32>
    %68 = vector.broadcast %67 : vector<8x1xf32> to vector<8x8xf32>
    %69 = arith.mulf %64, %68 : vector<8x8xf32>
    %70 = arith.truncf %69 : vector<8x8xf32> to vector<8x8xbf16>
    %cst_23 = arith.constant dense<0.000000e+00> : vector<8x8xf32>
    %71 = tpu.matmul %70, %57, %cst_23 {dimension_numbers = #tpu.dot_dimension_numbers<[1], [0], [0], [1], [0, 0, 1, 1], [], []>} : vector<8x8xbf16>, vector<8x8xbf16>, vector<8x8xf32> -> vector<8x8xf32>
    %72 = arith.truncf %71 : vector<8x8xf32> to vector<8x8xbf16>
    %c0_24 = arith.constant 0 : index
    %c16 = arith.constant 16 : index
    %73 = vector.load %arg16[%c0_24, %c16] : memref<8x32xbf16, #tpu.memory_space<vmem>>, vector<8x8xbf16>
    tpu.vector_store %arg16[%c0_24, %c16], %72 {strides = array<i32>} : memref<8x32xbf16, #tpu.memory_space<vmem>>, vector<8x8xbf16>,
    %74 = vector.extract_strided_slice %12 {offsets = [0, 24], sizes = [8, 8], strides = [1, 1]} : vector<8x32xbf16> to vector<8x8xbf16>
    %75 = vector.extract_strided_slice %14 {offsets = [0, 24], sizes = [8, 8], strides = [1, 1]} : vector<8x32xbf16> to vector<8x8xbf16>
    %76 = vector.extract_strided_slice %16 {offsets = [0, 24], sizes = [8, 8], strides = [1, 1]} : vector<8x32xbf16> to vector<8x8xbf16>
    %cst_25 = arith.constant dense<0.000000e+00> : vector<8x8xf32>
    %77 = tpu.matmul %74, %75, %cst_25 {dimension_numbers = #tpu.dot_dimension_numbers<[1], [1], [0], [0], [0, 0, 1, 0], [], []>} : vector<8x8xbf16>, vector<8x8xbf16>, vector<8x8xf32> -> vector<8x8xf32>
    %78 = arith.addf %77, %10 : vector<8x8xf32>
    %cst_26 = arith.constant dense<0xFF800000> : vector<8xf32>
    %79 = vector.multi_reduction <maximumf>, %78, %cst_26 [1] : vector<8x8xf32> to vector<8xf32>
    %80 = vector.shape_cast %79 : vector<8xf32> to vector<8x1xf32>
    %81 = vector.broadcast %80 : vector<8x1xf32> to vector<8x8xf32>
    %82 = arith.subf %78, %81 : vector<8x8xf32>
    %83 = math.exp %82 : vector<8x8xf32>
    %cst_27 = arith.constant dense<0.000000e+00> : vector<8xf32>
    %84 = vector.multi_reduction <add>, %83, %cst_27 [1] : vector<8x8xf32> to vector<8xf32>
    %85 = vector.shape_cast %84 : vector<8xf32> to vector<8x1xf32>
    %86 = tpu.reciprocal %85 {approx = true} : vector<8x1xf32> -> vector<8x1xf32>
    %87 = vector.broadcast %86 : vector<8x1xf32> to vector<8x8xf32>
    %88 = arith.mulf %83, %87 : vector<8x8xf32>
    %89 = arith.truncf %88 : vector<8x8xf32> to vector<8x8xbf16>
    %cst_28 = arith.constant dense<0.000000e+00> : vector<8x8xf32>
    %90 = tpu.matmul %89, %76, %cst_28 {dimension_numbers = #tpu.dot_dimension_numbers<[1], [0], [0], [1], [0, 0, 1, 1], [], []>} : vector<8x8xbf16>, vector<8x8xbf16>, vector<8x8xf32> -> vector<8x8xf32>
    %91 = arith.truncf %90 : vector<8x8xf32> to vector<8x8xbf16>
    %c0_29 = arith.constant 0 : index
    %c24 = arith.constant 24 : index
    %92 = vector.load %arg16[%c0_29, %c24] : memref<8x32xbf16, #tpu.memory_space<vmem>>, vector<8x8xbf16>
    tpu.vector_store %arg16[%c0_29, %c24], %91 {strides = array<i32>} : memref<8x32xbf16, #tpu.memory_space<vmem>>, vector<8x8xbf16>,
    %c0_30 = arith.constant 0 : index
    %c0_31 = arith.constant 0 : index
    %93 = vector.load %arg16[%c0_30, %c0_31] : memref<8x32xbf16, #tpu.memory_space<vmem>>, vector<8x32xbf16>
    %c0_32 = arith.constant 0 : index
    %c0_33 = arith.constant 0 : index
    %94 = vector.load %arg5[%c0_32, %c0_33] : memref<32x32xbf16, #tpu.memory_space<vmem>>, vector<32x32xbf16>
    %cst_34 = arith.constant dense<0.000000e+00> : vector<8x32xf32>
    %95 = tpu.matmul %93, %94, %cst_34 {dimension_numbers = #tpu.dot_dimension_numbers<[1], [0], [0], [1], [0, 0, 1, 1], [], []>} : vector<8x32xbf16>, vector<32x32xbf16>, vector<8x32xf32> -> vector<8x32xf32>
    %c0_35 = arith.constant 0 : index
    %c0_36 = arith.constant 0 : index
    %96 = vector.load %arg6[%c0_35, %c0_36] : memref<1x32xf32, #tpu.memory_space<vmem>>, vector<1x32xf32>
    %97 = vector.broadcast %96 : vector<1x32xf32> to vector<8x32xf32>
    %98 = arith.addf %95, %97 : vector<8x32xf32>
    %99 = arith.extf %1 : vector<8x32xbf16> to vector<8x32xf32>
    %100 = arith.addf %98, %99 : vector<8x32xf32>
    %c0_37 = arith.constant 0 : index
    %c0_38 = arith.constant 0 : index
    %101 = vector.load %arg7[%c0_37, %c0_38] : memref<1x32xf32, #tpu.memory_space<vmem>>, vector<1x32xf32>
    %c0_39 = arith.constant 0 : index
    %c0_40 = arith.constant 0 : index
    %102 = vector.load %arg8[%c0_39, %c0_40] : memref<1x32xf32, #tpu.memory_space<vmem>>, vector<1x32xf32>
    %cst_41 = arith.constant dense<0.000000e+00> : vector<8xf32>
    %103 = vector.multi_reduction <add>, %100, %cst_41 [1] : vector<8x32xf32> to vector<8xf32>
    %104 = vector.shape_cast %103 : vector<8xf32> to vector<8x1xf32>
    %cst_42 = arith.constant 3.200000e+01 : f32
    %105 = vector.broadcast %cst_42 : f32 to vector<8x1xf32>
    %106 = arith.divf %104, %105 : vector<8x1xf32>
    %107 = vector.broadcast %106 : vector<8x1xf32> to vector<8x32xf32>
    %108 = arith.subf %100, %107 : vector<8x32xf32>
    %109 = arith.mulf %108, %108 : vector<8x32xf32>
    %cst_43 = arith.constant dense<0.000000e+00> : vector<8xf32>
    %110 = vector.multi_reduction <add>, %109, %cst_43 [1] : vector<8x32xf32> to vector<8xf32>
    %111 = vector.shape_cast %110 : vector<8xf32> to vector<8x1xf32>
    %cst_44 = arith.constant 3.200000e+01 : f32
    %112 = vector.broadcast %cst_44 : f32 to vector<8x1xf32>
    %113 = arith.divf %111, %112 : vector<8x1xf32>
    %114 = vector.broadcast %106 : vector<8x1xf32> to vector<8x32xf32>
    %115 = arith.subf %100, %114 : vector<8x32xf32>
    %cst_45 = arith.constant 9.99999996E-13 : f32
    %116 = vector.broadcast %cst_45 : f32 to vector<8x1xf32>
    %117 = arith.addf %113, %116 : vector<8x1xf32>
    %118 = math.rsqrt %117 : vector<8x1xf32>
    %119 = vector.broadcast %118 : vector<8x1xf32> to vector<8x32xf32>
    %120 = arith.mulf %115, %119 : vector<8x32xf32>
    %121 = vector.broadcast %101 : vector<1x32xf32> to vector<8x32xf32>
    %122 = arith.mulf %120, %121 : vector<8x32xf32>
    %123 = vector.broadcast %102 : vector<1x32xf32> to vector<8x32xf32>
    %124 = arith.addf %122, %123 : vector<8x32xf32>
    %125 = arith.truncf %124 : vector<8x32xf32> to vector<8x32xbf16>
    %c0_46 = arith.constant 0 : index
    %c0_47 = arith.constant 0 : index
    %126 = vector.load %arg9[%c0_46, %c0_47] : memref<32x64xbf16, #tpu.memory_space<vmem>>, vector<32x64xbf16>
    %cst_48 = arith.constant dense<0.000000e+00> : vector<8x64xf32>
    %127 = tpu.matmul %125, %126, %cst_48 {dimension_numbers = #tpu.dot_dimension_numbers<[1], [0], [0], [1], [0, 0, 1, 1], [], []>} : vector<8x32xbf16>, vector<32x64xbf16>, vector<8x64xf32> -> vector<8x64xf32>
    %c0_49 = arith.constant 0 : index
    %c0_50 = arith.constant 0 : index
    %128 = vector.load %arg10[%c0_49, %c0_50] : memref<1x64xf32, #tpu.memory_space<vmem>>, vector<1x64xf32>
    %129 = vector.broadcast %128 : vector<1x64xf32> to vector<8x64xf32>
    %130 = arith.addf %127, %129 : vector<8x64xf32>
    %131 = arith.mulf %130, %130 : vector<8x64xf32>
    %132 = arith.mulf %130, %131 : vector<8x64xf32>
    %cst_51 = arith.constant 4.471500e-02 : f32
    %133 = vector.broadcast %cst_51 : f32 to vector<8x64xf32>
    %134 = arith.mulf %133, %132 : vector<8x64xf32>
    %135 = arith.addf %130, %134 : vector<8x64xf32>
    %cst_52 = arith.constant 0.797884583 : f32
    %136 = vector.broadcast %cst_52 : f32 to vector<8x64xf32>
    %137 = arith.mulf %136, %135 : vector<8x64xf32>
    %138 = math.tanh %137 : vector<8x64xf32>
    %cst_53 = arith.constant 1.000000e+00 : f32
    %139 = vector.broadcast %cst_53 : f32 to vector<8x64xf32>
    %140 = arith.addf %139, %138 : vector<8x64xf32>
    %cst_54 = arith.constant 5.000000e-01 : f32
    %141 = vector.broadcast %cst_54 : f32 to vector<8x64xf32>
    %142 = arith.mulf %141, %140 : vector<8x64xf32>
    %143 = arith.mulf %130, %142 : vector<8x64xf32>
    %144 = arith.truncf %143 : vector<8x64xf32> to vector<8x64xbf16>
    %c0_55 = arith.constant 0 : index
    %c0_56 = arith.constant 0 : index
    %145 = vector.load %arg11[%c0_55, %c0_56] : memref<64x32xbf16, #tpu.memory_space<vmem>>, vector<64x32xbf16>
    %cst_57 = arith.constant dense<0.000000e+00> : vector<8x32xf32>
    %146 = tpu.matmul %144, %145, %cst_57 {dimension_numbers = #tpu.dot_dimension_numbers<[1], [0], [0], [1], [0, 0, 1, 1], [], []>} : vector<8x64xbf16>, vector<64x32xbf16>, vector<8x32xf32> -> vector<8x32xf32>
    %c0_58 = arith.constant 0 : index
    %c0_59 = arith.constant 0 : index
    %147 = vector.load %arg12[%c0_58, %c0_59] : memref<1x32xf32, #tpu.memory_space<vmem>>, vector<1x32xf32>
    %148 = vector.broadcast %147 : vector<1x32xf32> to vector<8x32xf32>
    %149 = arith.addf %146, %148 : vector<8x32xf32>
    %150 = arith.addf %149, %124 : vector<8x32xf32>
    %c0_60 = arith.constant 0 : index
    %c0_61 = arith.constant 0 : index
    %151 = vector.load %arg13[%c0_60, %c0_61] : memref<1x32xf32, #tpu.memory_space<vmem>>, vector<1x32xf32>
    %c0_62 = arith.constant 0 : index
    %c0_63 = arith.constant 0 : index
    %152 = vector.load %arg14[%c0_62, %c0_63] : memref<1x32xf32, #tpu.memory_space<vmem>>, vector<1x32xf32>
    %cst_64 = arith.constant dense<0.000000e+00> : vector<8xf32>
    %153 = vector.multi_reduction <add>, %150, %cst_64 [1] : vector<8x32xf32> to vector<8xf32>
    %154 = vector.shape_cast %153 : vector<8xf32> to vector<8x1xf32>
    %cst_65 = arith.constant 3.200000e+01 : f32
    %155 = vector.broadcast %cst_65 : f32 to vector<8x1xf32>
    %156 = arith.divf %154, %155 : vector<8x1xf32>
    %157 = vector.broadcast %156 : vector<8x1xf32> to vector<8x32xf32>
    %158 = arith.subf %150, %157 : vector<8x32xf32>
    %159 = arith.mulf %158, %158 : vector<8x32xf32>
    %cst_66 = arith.constant dense<0.000000e+00> : vector<8xf32>
    %160 = vector.multi_reduction <add>, %159, %cst_66 [1] : vector<8x32xf32> to vector<8xf32>
    %161 = vector.shape_cast %160 : vector<8xf32> to vector<8x1xf32>
    %cst_67 = arith.constant 3.200000e+01 : f32
    %162 = vector.broadcast %cst_67 : f32 to vector<8x1xf32>
    %163 = arith.divf %161, %162 : vector<8x1xf32>
    %164 = vector.broadcast %156 : vector<8x1xf32> to vector<8x32xf32>
    %165 = arith.subf %150, %164 : vector<8x32xf32>
    %cst_68 = arith.constant 9.99999996E-13 : f32
    %166 = vector.broadcast %cst_68 : f32 to vector<8x1xf32>
    %167 = arith.addf %163, %166 : vector<8x1xf32>
    %168 = math.rsqrt %167 : vector<8x1xf32>
    %169 = vector.broadcast %168 : vector<8x1xf32> to vector<8x32xf32>
    %170 = arith.mulf %165, %169 : vector<8x32xf32>
    %171 = vector.broadcast %151 : vector<1x32xf32> to vector<8x32xf32>
    %172 = arith.mulf %170, %171 : vector<8x32xf32>
    %173 = vector.broadcast %152 : vector<1x32xf32> to vector<8x32xf32>
    %174 = arith.addf %172, %173 : vector<8x32xf32>
    %175 = arith.truncf %174 : vector<8x32xf32> to vector<8x32xbf16>
    %c0_69 = arith.constant 0 : index
    %c0_70 = arith.constant 0 : index
    %c0_71 = arith.constant 0 : index
    %176 = vector.load %arg15[%c0_69, %c0_70, %c0_71] : memref<1x8x32xbf16, #tpu.memory_space<vmem>>, vector<1x8x32xbf16>
    %177 = vector.shape_cast %176 : vector<1x8x32xbf16> to vector<8x32xbf16>
    %178 = vector.shape_cast %175 : vector<8x32xbf16> to vector<1x8x32xbf16>
    tpu.vector_store %arg15[%c0_69, %c0_70, %c0_71], %178 {strides = array<i32>} : memref<1x8x32xbf16, #tpu.memory_space<vmem>>, vector<1x8x32xbf16>,
    return
  }
  func.func @transform_0(%arg0: i32) -> (i32, i32, i32) {
    %c0_i32 = arith.constant 0 : i32
    %c0_i32_0 = arith.constant 0 : i32
    %c0_i32_1 = arith.constant 0 : i32
    return %arg0, %c0_i32, %c0_i32_0 : i32, i32, i32
  }
  func.func @transform_1(%arg0: i32) -> (i32, i32, i32) {
    %c0_i32 = arith.constant 0 : i32
    %c0_i32_0 = arith.constant 0 : i32
    %c0_i32_1 = arith.constant 0 : i32
    return %arg0, %c0_i32, %c0_i32_0 : i32, i32, i32
  }
  func.func @transform_2(%arg0: i32) -> (i32, i32) {
    %c0_i32 = arith.constant 0 : i32
    %c0_i32_0 = arith.constant 0 : i32
    %c0_i32_1 = arith.constant 0 : i32
    return %c0_i32, %c0_i32_0 : i32, i32
  }
  func.func @transform_3(%arg0: i32) -> (i32, i32) {
    %c0_i32 = arith.constant 0 : i32
    %c0_i32_0 = arith.constant 0 : i32
    %c0_i32_1 = arith.constant 0 : i32
    return %c0_i32, %c0_i32_0 : i32, i32
  }
  func.func @transform_4(%arg0: i32) -> (i32, i32) {
    %c0_i32 = arith.constant 0 : i32
    %c0_i32_0 = arith.constant 0 : i32
    %c0_i32_1 = arith.constant 0 : i32
    return %c0_i32, %c0_i32_0 : i32, i32
  }
  func.func @transform_5(%arg0: i32) -> (i32, i32) {
    %c0_i32 = arith.constant 0 : i32
    %c0_i32_0 = arith.constant 0 : i32
    %c0_i32_1 = arith.constant 0 : i32
    return %c0_i32, %c0_i32_0 : i32, i32
  }
  func.func @transform_6(%arg0: i32) -> (i32, i32) {
    %c0_i32 = arith.constant 0 : i32
    %c0_i32_0 = arith.constant 0 : i32
    %c0_i32_1 = arith.constant 0 : i32
    return %c0_i32, %c0_i32_0 : i32, i32
  }
  func.func @transform_7(%arg0: i32) -> (i32, i32) {
    %c0_i32 = arith.constant 0 : i32
    %c0_i32_0 = arith.constant 0 : i32
    %c0_i32_1 = arith.constant 0 : i32
    return %c0_i32, %c0_i32_0 : i32, i32
  }
  func.func @transform_8(%arg0: i32) -> (i32, i32) {
    %c0_i32 = arith.constant 0 : i32
    %c0_i32_0 = arith.constant 0 : i32
    %c0_i32_1 = arith.constant 0 : i32
    return %c0_i32, %c0_i32_0 : i32, i32
  }
  func.func @transform_9(%arg0: i32) -> (i32, i32) {
    %c0_i32 = arith.constant 0 : i32
    %c0_i32_0 = arith.constant 0 : i32
    %c0_i32_1 = arith.constant 0 : i32
    return %c0_i32, %c0_i32_0 : i32, i32
  }
  func.func @transform_10(%arg0: i32) -> (i32, i32) {
    %c0_i32 = arith.constant 0 : i32
    %c0_i32_0 = arith.constant 0 : i32
    %c0_i32_1 = arith.constant 0 : i32
    return %c0_i32, %c0_i32_0 : i32, i32
  }
  func.func @transform_11(%arg0: i32) -> (i32, i32) {
    %c0_i32 = arith.constant 0 : i32
    %c0_i32_0 = arith.constant 0 : i32
    %c0_i32_1 = arith.constant 0 : i32
    return %c0_i32, %c0_i32_0 : i32, i32
  }
  func.func @transform_12(%arg0: i32) -> (i32, i32) {
    %c0_i32 = arith.constant 0 : i32
    %c0_i32_0 = arith.constant 0 : i32
    %c0_i32_1 = arith.constant 0 : i32
    return %c0_i32, %c0_i32_0 : i32, i32
  }
  func.func @transform_13(%arg0: i32) -> (i32, i32) {
    %c0_i32 = arith.constant 0 : i32
    %c0_i32_0 = arith.constant 0 : i32
    %c0_i32_1 = arith.constant 0 : i32
    return %c0_i32, %c0_i32_0 : i32, i32
  }
  func.func @transform_14(%arg0: i32) -> (i32, i32, i32) {
    %c0_i32 = arith.constant 0 : i32
    %c0_i32_0 = arith.constant 0 : i32
    %c0_i32_1 = arith.constant 0 : i32
    return %arg0, %c0_i32, %c0_i32_0 : i32, i32, i32
  }
}

module attributes {stable_mosaic.version = 11 : i64} {
  func.func @_pool_cls_kernel(%arg0: i32, %arg1: memref<2x32xbf16, #tpu.memory_space<vmem>>, %arg2: memref<32x32xbf16, #tpu.memory_space<vmem>>, %arg3: memref<1x32xf32, #tpu.memory_space<vmem>>, %arg4: memref<32x128xbf16, #tpu.memory_space<vmem>>, %arg5: memref<1x128xf32, #tpu.memory_space<vmem>>, %arg6: memref<2x128xf32, #tpu.memory_space<vmem>>) attributes {dimension_semantics = [#tpu.dimension_semantics<arbitrary>], iteration_bounds = array<i64: 1>, scalar_prefetch = 0 : i64, scratch_operands = 0 : i64, tpu.core_type = #tpu.core_type<tc>, window_params = [{pipeline_mode = #tpu.pipeline_mode<synchronous>, transform_indices = @transform_0, window_bounds = array<i64: 2, 32>}, {pipeline_mode = #tpu.pipeline_mode<synchronous>, transform_indices = @transform_1, window_bounds = array<i64: 32, 32>}, {pipeline_mode = #tpu.pipeline_mode<synchronous>, transform_indices = @transform_2, window_bounds = array<i64: 1, 32>}, {pipeline_mode = #tpu.pipeline_mode<synchronous>, transform_indices = @transform_3, window_bounds = array<i64: 32, 128>}, {pipeline_mode = #tpu.pipeline_mode<synchronous>, transform_indices = @transform_4, window_bounds = array<i64: 1, 128>}, {pipeline_mode = #tpu.pipeline_mode<synchronous>, transform_indices = @transform_5, window_bounds = array<i64: 2, 128>}]} {
    %c0 = arith.constant 0 : index
    %c0_0 = arith.constant 0 : index
    %0 = vector.load %arg1[%c0, %c0_0] : memref<2x32xbf16, #tpu.memory_space<vmem>>, vector<2x32xbf16>
    %c0_1 = arith.constant 0 : index
    %c0_2 = arith.constant 0 : index
    %1 = vector.load %arg2[%c0_1, %c0_2] : memref<32x32xbf16, #tpu.memory_space<vmem>>, vector<32x32xbf16>
    %cst = arith.constant dense<0.000000e+00> : vector<2x32xf32>
    %2 = tpu.matmul %0, %1, %cst {dimension_numbers = #tpu.dot_dimension_numbers<[1], [0], [0], [1], [0, 0, 1, 1], [], []>} : vector<2x32xbf16>, vector<32x32xbf16>, vector<2x32xf32> -> vector<2x32xf32>
    %c0_3 = arith.constant 0 : index
    %c0_4 = arith.constant 0 : index
    %3 = vector.load %arg3[%c0_3, %c0_4] : memref<1x32xf32, #tpu.memory_space<vmem>>, vector<1x32xf32>
    %4 = vector.broadcast %3 : vector<1x32xf32> to vector<2x32xf32>
    %5 = arith.addf %2, %4 : vector<2x32xf32>
    %6 = math.tanh %5 : vector<2x32xf32>
    %7 = arith.truncf %6 : vector<2x32xf32> to vector<2x32xbf16>
    %c0_5 = arith.constant 0 : index
    %c0_6 = arith.constant 0 : index
    %8 = vector.load %arg4[%c0_5, %c0_6] : memref<32x128xbf16, #tpu.memory_space<vmem>>, vector<32x128xbf16>
    %cst_7 = arith.constant dense<0.000000e+00> : vector<2x128xf32>
    %9 = tpu.matmul %7, %8, %cst_7 {dimension_numbers = #tpu.dot_dimension_numbers<[1], [0], [0], [1], [0, 0, 1, 1], [], []>} : vector<2x32xbf16>, vector<32x128xbf16>, vector<2x128xf32> -> vector<2x128xf32>
    %c0_8 = arith.constant 0 : index
    %c0_9 = arith.constant 0 : index
    %10 = vector.load %arg5[%c0_8, %c0_9] : memref<1x128xf32, #tpu.memory_space<vmem>>, vector<1x128xf32>
    %11 = vector.broadcast %10 : vector<1x128xf32> to vector<2x128xf32>
    %12 = arith.addf %9, %11 : vector<2x128xf32>
    %c0_10 = arith.constant 0 : index
    %c0_11 = arith.constant 0 : index
    %13 = vector.load %arg6[%c0_10, %c0_11] : memref<2x128xf32, #tpu.memory_space<vmem>>, vector<2x128xf32>
    tpu.vector_store %arg6[%c0_10, %c0_11], %12 {strides = array<i32>} : memref<2x128xf32, #tpu.memory_space<vmem>>, vector<2x128xf32>,
    return
  }
  func.func @transform_0(%arg0: i32) -> (i32, i32) {
    %c0_i32 = arith.constant 0 : i32
    %c0_i32_0 = arith.constant 0 : i32
    %c0_i32_1 = arith.constant 0 : i32
    return %c0_i32, %c0_i32_0 : i32, i32
  }
  func.func @transform_1(%arg0: i32) -> (i32, i32) {
    %c0_i32 = arith.constant 0 : i32
    %c0_i32_0 = arith.constant 0 : i32
    %c0_i32_1 = arith.constant 0 : i32
    return %c0_i32, %c0_i32_0 : i32, i32
  }
  func.func @transform_2(%arg0: i32) -> (i32, i32) {
    %c0_i32 = arith.constant 0 : i32
    %c0_i32_0 = arith.constant 0 : i32
    %c0_i32_1 = arith.constant 0 : i32
    return %c0_i32, %c0_i32_0 : i32, i32
  }
  func.func @transform_3(%arg0: i32) -> (i32, i32) {
    %c0_i32 = arith.constant 0 : i32
    %c0_i32_0 = arith.constant 0 : i32
    %c0_i32_1 = arith.constant 0 : i32
    return %c0_i32, %c0_i32_0 : i32, i32
  }
  func.func @transform_4(%arg0: i32) -> (i32, i32) {
    %c0_i32 = arith.constant 0 : i32
    %c0_i32_0 = arith.constant 0 : i32
    %c0_i32_1 = arith.constant 0 : i32
    return %c0_i32, %c0_i32_0 : i32, i32
  }
  func.func @transform_5(%arg0: i32) -> (i32, i32) {
    %c0_i32 = arith.constant 0 : i32
    %c0_i32_0 = arith.constant 0 : i32
    %c0_i32_1 = arith.constant 0 : i32
    return %c0_i32, %c0_i32_0 : i32, i32
  }
}

</mosaic_0001>

<llo_original>
// kernel: forward.4
$region0: #{forward.4}
  #allocation0 [shape = 'u32[]', space=smem, size = 0x4, offset = 0x4, fixed_abs, tag = 'smem constant byte address 0x4 - core index']
  #allocation1 [shape = 'u32[144,128]{1,0:T(1,128)}', space=vmem, size = 0x12000, scoped, tag = 'internal scratch']
  %s0 = inlined_call_operand.vmem [shape: f32[2,8,32], index: 0, kind: input, shape index: {}]
  %s1 = inlined_call_operand.vmem [shape: f32[8,32], index: 1, kind: input, shape index: {}]
  %s2 = inlined_call_operand.vmem [shape: f32[1,32], index: 2, kind: input, shape index: {}]
  %s3 = inlined_call_operand.vmem [shape: f32[1,32], index: 3, kind: input, shape index: {}]
  %s4 = inlined_call_operand.vmem [shape: f32[1,32], index: 4, kind: input, shape index: {}]
  %s5 = inlined_call_operand.vmem [shape: bf16[2,8,32], index: 5, kind: output, shape index: {}]
  %s6 = sld [smem:[#allocation0]]
  $region53: #{forward.4} parent=0
    _
  %s8 = ssub.s32 1, %s6
  %s9 = scalar_select 0, %s8, %s6
  loop: start=0, step=1, limit=4
  $region2: #{forward.4} parent=0 // loop_pre_header
    _
  $region3: #{forward.4} parent=0 // loop_header
    %s11 = sphi 0, %s15
    %p12 = scmp.ge.s32.totalorder %s11, 4
    %s21 = sphi 0, %s23
    %s24 = sphi 0, %s21
    %s25 = sphi 0, %s24
    %s41 = sphi 0, %s25
    %s45 = sphi 0, %s45
    %s47 = sphi 0, %s45
    %s48 = sphi 0, %s47
    %s62 = sphi 0, %s48
    %s66 = sphi 0, %s66
    %s68 = sphi 0, %s66
    %s69 = sphi 0, %s68
    %s83 = sphi 0, %s69
    %s87 = sphi 0, %s87
    %s89 = sphi 0, %s87
    %s90 = sphi 0, %s89
    %s104 = sphi 0, %s90
    %s108 = sphi 0, %s108
    %s110 = sphi 0, %s108
    %s111 = sphi 0, %s110
    %s125 = sphi 0, %s111
    %s131 = sphi 0, %s133
    %s134 = sphi 0, %s131
    %s135 = sphi 0, %s134
    %s151 = sphi 0, %s135
  $region4: #{forward.4} parent=0 // loop_header_branch
    %14 = sbr.rel (%p12) target = $region8
  $region5: #{forward.4} parent=0 // loop_body
    %s16 = ssub.s32 %s11, 1
    %s17 = ssub.s32 %s11, 2
    %s18 = sadd.s32 %s11, 1
    %s19 = ssub.s32 %s11, %s18
    %p20 = scmp.eq.s32.totalorder %s19, 0
    %s22 = sadd.s32 %s21, 1
    %s23 = scalar_select %p20, %s21, %s22
    %p26 = pneg %p20
    %p27 = scmp.eq.s32.totalorder %s11, 1
    %p28 = por %p26, %p27
    %p29 = scmp.ne.s32.totalorder %s21, %s24
    %p30 = scmp.eq.s32.totalorder %s11, 0
    %p31 = por %p29, %p30
    %p32 = scmp.ne.s32.totalorder %s21, %s24
    %p33 = scmp.eq.s32.totalorder %s16, 1
    %p34 = por %p32, %p33
    %p35 = scmp.ne.s32.totalorder %s24, %s25
    %p36 = scmp.eq.s32.totalorder %s16, 0
    %p37 = por %p35, %p36
    %p38 = scmp.ne.s32.totalorder %s24, %s25
    %p39 = scmp.eq.s32.totalorder %s17, 1
    %p40 = por %p38, %p39
    %p42 = scmp.ne.s32.totalorder %s25, %s41
    %p43 = scmp.eq.s32.totalorder %s17, 0
    %p44 = por %p42, %p43
    %s46 = sadd.s32 %s45, 1
    %p49 = scmp.eq.s32.totalorder %s11, 1
    %p50 = scmp.ne.s32.totalorder %s45, %s47
    %p51 = scmp.eq.s32.totalorder %s11, 0
    %p52 = por %p50, %p51
    %p53 = scmp.ne.s32.totalorder %s45, %s47
    %p54 = scmp.eq.s32.totalorder %s16, 1
    %p55 = por %p53, %p54
    %p56 = scmp.ne.s32.totalorder %s47, %s48
    %p57 = scmp.eq.s32.totalorder %s16, 0
    %p58 = por %p56, %p57
    %p59 = scmp.ne.s32.totalorder %s47, %s48
    %p60 = scmp.eq.s32.totalorder %s17, 1
    %p61 = por %p59, %p60
    %p63 = scmp.ne.s32.totalorder %s48, %s62
    %p64 = scmp.eq.s32.totalorder %s17, 0
    %p65 = por %p63, %p64
    %s67 = sadd.s32 %s66, 1
    %p70 = scmp.eq.s32.totalorder %s11, 1
    %p71 = scmp.ne.s32.totalorder %s66, %s68
    %p72 = scmp.eq.s32.totalorder %s11, 0
    %p73 = por %p71, %p72
    %p74 = scmp.ne.s32.totalorder %s66, %s68
    %p75 = scmp.eq.s32.totalorder %s16, 1
    %p76 = por %p74, %p75
    %p77 = scmp.ne.s32.totalorder %s68, %s69
    %p78 = scmp.eq.s32.totalorder %s16, 0
    %p79 = por %p77, %p78
    %p80 = scmp.ne.s32.totalorder %s68, %s69
    %p81 = scmp.eq.s32.totalorder %s17, 1
    %p82 = por %p80, %p81
    %p84 = scmp.ne.s32.totalorder %s69, %s83
    %p85 = scmp.eq.s32.totalorder %s17, 0
    %p86 = por %p84, %p85
    %s88 = sadd.s32 %s87, 1
    %p91 = scmp.eq.s32.totalorder %s11, 1
    %p92 = scmp.ne.s32.totalorder %s87, %s89
    %p93 = scmp.eq.s32.totalorder %s11, 0
    %p94 = por %p92, %p93
    %p95 = scmp.ne.s32.totalorder %s87, %s89
    %p96 = scmp.eq.s32.totalorder %s16, 1
    %p97 = por %p95, %p96
    %p98 = scmp.ne.s32.totalorder %s89, %s90
    %p99 = scmp.eq.s32.totalorder %s16, 0
    %p100 = por %p98, %p99
    %p101 = scmp.ne.s32.totalorder %s89, %s90
    %p102 = scmp.eq.s32.totalorder %s17, 1
    %p103 = por %p101, %p102
    %p105 = scmp.ne.s32.totalorder %s90, %s104
    %p106 = scmp.eq.s32.totalorder %s17, 0
    %p107 = por %p105, %p106
    %s109 = sadd.s32 %s108, 1
    %p112 = scmp.eq.s32.totalorder %s11, 1
    %p113 = scmp.ne.s32.totalorder %s108, %s110
    %p114 = scmp.eq.s32.totalorder %s11, 0
    %p115 = por %p113, %p114
    %p116 = scmp.ne.s32.totalorder %s108, %s110
    %p117 = scmp.eq.s32.totalorder %s16, 1
    %p118 = por %p116, %p117
    %p119 = scmp.ne.s32.totalorder %s110, %s111
    %p120 = scmp.eq.s32.totalorder %s16, 0
    %p121 = por %p119, %p120
    %p122 = scmp.ne.s32.totalorder %s110, %s111
    %p123 = scmp.eq.s32.totalorder %s17, 1
    %p124 = por %p122, %p123
    %p126 = scmp.ne.s32.totalorder %s111, %s125
    %p127 = scmp.eq.s32.totalorder %s17, 0
    %p128 = por %p126, %p127
    %s129 = ssub.s32 %s11, %s18
    %p130 = scmp.eq.s32.totalorder %s129, 0
    %s132 = sadd.s32 %s131, 1
    %s133 = scalar_select %p130, %s131, %s132
    %p136 = pneg %p130
    %p137 = scmp.eq.s32.totalorder %s11, 1
    %p138 = por %p136, %p137
    %p139 = scmp.ne.s32.totalorder %s131, %s134
    %p140 = scmp.eq.s32.totalorder %s11, 0
    %p141 = por %p139, %p140
    %p142 = scmp.ne.s32.totalorder %s131, %s134
    %p143 = scmp.eq.s32.totalorder %s16, 1
    %p144 = por %p142, %p143
    %p145 = scmp.ne.s32.totalorder %s134, %s135
    %p146 = scmp.eq.s32.totalorder %s16, 0
    %p147 = por %p145, %p146
    %p148 = scmp.ne.s32.totalorder %s134, %s135
    %p149 = scmp.eq.s32.totalorder %s17, 1
    %p150 = por %p148, %p149
    %p152 = scmp.ne.s32.totalorder %s135, %s151
    %p153 = scmp.eq.s32.totalorder %s17, 0
    %p154 = por %p152, %p153
    %p155 = scmp.le.s32.totalorder 1, %s11
    %p156 = scmp.lt.s32.totalorder %s11, 3
    %p157 = pnand %p155, %p156
    %p158 = pneg %p157
    // Predicated region
    $region9: #{forward.4} parent=5 // pred_check
      _
    $region10: #{forward.4} parent=5 // pred_check_branch
      %160 = sbr.rel (%p157) target = $region12
    $region11: #{forward.4} parent=5 // pred_region
      %s161 = ssub.s32 %s11, 1
      // Predicated region
      $region13: #{forward.4} parent=11 // pred_check
        %p162 = pneg %p58
      $region14: #{forward.4} parent=11 // pred_check_branch
        %164 = sbr.rel (%p162) target = $region16
      $region15: #{forward.4} parent=11 // pred_region
        _
      $region16: #{forward.4} parent=11 // pred_fallthru
        _
      // Predicated region
      $region17: #{forward.4} parent=11 // pred_check
        %p165 = pneg %p79
      $region18: #{forward.4} parent=11 // pred_check_branch
        %167 = sbr.rel (%p165) target = $region20
      $region19: #{forward.4} parent=11 // pred_region
        _
      $region20: #{forward.4} parent=11 // pred_fallthru
        _
      // Predicated region
      $region21: #{forward.4} parent=11 // pred_check
        %p168 = pneg %p100
      $region22: #{forward.4} parent=11 // pred_check_branch
        %170 = sbr.rel (%p168) target = $region24
      $region23: #{forward.4} parent=11 // pred_region
        _
      $region24: #{forward.4} parent=11 // pred_fallthru
        _
      // Predicated region
      $region25: #{forward.4} parent=11 // pred_check
        %p171 = pneg %p121
      $region26: #{forward.4} parent=11 // pred_check_branch
        %173 = sbr.rel (%p171) target = $region28
      $region27: #{forward.4} parent=11 // pred_region
        _
      $region28: #{forward.4} parent=11 // pred_fallthru
        _
    $region12: #{forward.4} parent=5 // pred_fallthru
      _
    %p174 = scmp.lt.s32.totalorder %s11, 2
    // Predicated region
    $region29: #{forward.4} parent=5 // pred_check
      %p175 = pneg %p174
    $region30: #{forward.4} parent=5 // pred_check_branch
      %177 = sbr.rel (%p175) target = $region32
    $region31: #{forward.4} parent=5 // pred_region
      // Predicated region
      $region33: #{forward.4} parent=31 // pred_check
        %p178 = pneg %p31
      $region34: #{forward.4} parent=31 // pred_check_branch
        %180 = sbr.rel (%p178) target = $region36
      $region35: #{forward.4} parent=31 // pred_region
        %p181 = scmp.lt.s32.totalorder %s11, 1
        %s182 = scalar_select %p181, %s11, 1
        %s183 = smul.addr %s182, 8
        %s184 = scalar_lea.vmem %s0, %s183
      $region36: #{forward.4} parent=31 // pred_fallthru
        _
    $region32: #{forward.4} parent=5 // pred_fallthru
      _
    %p185 = scmp.le.s32.totalorder 1, %s11
    %p186 = scmp.lt.s32.totalorder %s11, 3
    %p187 = pnand %p185, %p186
    %p188 = pneg %p187
    // Predicated region
    $region37: #{forward.4} parent=5 // pred_check
      _
    $region38: #{forward.4} parent=5 // pred_check_branch
      %190 = sbr.rel (%p187) target = $region40
    $region39: #{forward.4} parent=5 // pred_region
      %s191 = ssub.s32 %s11, 1
      %p192 = scmp.lt.s32.totalorder %s16, 1
      %s193 = scalar_select %p192, %s16, 1
      %s194 = smul.addr %s193, 8
      %s195 = scalar_lea.vmem %s0, %s194
      %p196 = pneg %p37
      %p197 = pneg %p34
      %p198 = pneg %p58
      %p199 = pneg %p55
      %p200 = pneg %p79
      %p201 = pneg %p76
      %p202 = pneg %p100
      %p203 = pneg %p97
      %p204 = pneg %p121
      %p205 = pneg %p118
      %p206 = pneg %p147
      %p207 = pneg %p144
      %p208 = scmp.lt.s32.totalorder %s16, 1
      %s209 = scalar_select %p208, %s16, 1
      %s210 = smul.addr %s209, 4
      %s211 = scalar_lea.vmem %s5, %s210
      %p212 = scmp.lt.s32.totalorder %s16, 1
      %s213 = scalar_select %p212, %s16, 1
      %s214 = smul.addr %s213, 8
      %s215 = scalar_lea.vmem %s0, %s214
      %p216 = scmp.lt.s32.totalorder %s16, 1
      %s217 = scalar_select %p216, %s16, 1
      %s218 = smul.addr %s217, 4
      %s219 = scalar_lea.vmem %s5, %s218
      %v220 = vld [vmem:[%s215] sm:$0xff]
      %v221 = vld [vmem:[%s1] sm:$0xff]
      %v222 = vadd.f32 %v220, %v221
      %v223 = vld [vmem:[%s2] sm:$0x1]
      %v225 = vlaneseq
      %v226 = vshrl.u32 %v225, 7
      %v227 = vsub.s32 0, %v226
      %v228 = vrot.slane %v223, %v227
      %v230 = vadd.f32 %v222, %v228
      %v231 = vld [vmem:[%s3] sm:$0x1]
      %v232 = vld [vmem:[%s4] sm:$0x1]
      %vm233 = vcmask 261120
      %v234 = vsel %vm233, %v230, 0.0
      %235 = vadd.xlane.f32.xlu0 %v234
      %v236 = vpop.xlane.xlu0 %235
      %v237 = vrcp.pop 32.0
      %v238 = vmul.f32 %v236, %v237
      %v239 = vsub.f32 %v230, %v238
      %v240 = vmul.f32 %v239, %v239
      %v241 = vsel %vm233, %v240, 0.0
      %242 = vadd.xlane.f32.xlu0 %v241
      %v243 = vpop.xlane.xlu0 %242
      %v244 = vmul.f32 %v243, %v237
      %v245 = vadd.f32 %v244, 1e-12
      %v246 = vrsqrt.pop %v245
      %v247 = vmul.f32 %v239, %v246
      %v249 = vlaneseq
      %v250 = vshrl.u32 %v249, 7
      %v251 = vsub.s32 0, %v250
      %v252 = vrot.slane %v231, %v251
      %v254 = vmul.f32 %v247, %v252
      %v256 = vlaneseq
      %v257 = vshrl.u32 %v256, 7
      %v258 = vsub.s32 0, %v257
      %v259 = vrot.slane %v232, %v258
      %v261 = vadd.f32 %v254, %v259
      %v262 = vpack.c.bf16 %v261, %v261
      %vm263 = vcmask 257024
      %264 = vst.msk [vmem:[%s219] sm:$0xf] %vm263, %v262
      %p265 = scmp.lt.s32.totalorder %s16, 1
      %s266 = scalar_select %p265, %s16, 1
      %s267 = smul.addr %s266, 4
      %s268 = scalar_lea.vmem %s5, %s267
      // Predicated region
      $region41: #{forward.4} parent=39 // pred_check
        %p269 = pneg %p144
      $region42: #{forward.4} parent=39 // pred_check_branch
        %271 = sbr.rel (%p269) target = $region44
      $region43: #{forward.4} parent=39 // pred_region
        _
      $region44: #{forward.4} parent=39 // pred_fallthru
        _
    $region40: #{forward.4} parent=5 // pred_fallthru
      _
    %p272 = scmp.le.s32.totalorder 2, %s11
    // Predicated region
    $region45: #{forward.4} parent=5 // pred_check
      %p273 = pneg %p272
    $region46: #{forward.4} parent=5 // pred_check_branch
      %275 = sbr.rel (%p273) target = $region48
    $region47: #{forward.4} parent=5 // pred_region
      %s276 = ssub.s32 %s11, 2
      // Predicated region
      $region49: #{forward.4} parent=47 // pred_check
        %p277 = pneg %p150
      $region50: #{forward.4} parent=47 // pred_check_branch
        %279 = sbr.rel (%p277) target = $region52
      $region51: #{forward.4} parent=47 // pred_region
        %p280 = scmp.lt.s32.totalorder %s17, 1
        %s281 = scalar_select %p280, %s17, 1
        %s282 = smul.addr %s281, 4
        %s283 = scalar_lea.vmem %s5, %s282
      $region52: #{forward.4} parent=47 // pred_fallthru
        _
    $region48: #{forward.4} parent=5 // pred_fallthru
      _
  $region6: #{forward.4} parent=0 // loop_footer
    %s15 = sadd.s32 1, %s11
  $region7: #{forward.4} parent=0 // loop_footer_branch
    %10 = sbr.rel target = $region3
  $region8: #{forward.4} parent=0 // loop_exit
    _

// kernel: forward.7
$region0: #{forward.7}
  #allocation0 [shape = 'u32[]', space=smem, size = 0x4, offset = 0x4, fixed_abs, tag = 'smem constant byte address 0x4 - core index']
  #allocation1 [shape = 'u32[144,128]{1,0:T(1,128)}', space=vmem, size = 0x12000, scoped, tag = 'internal scratch']
  %s0 = inlined_call_operand.vmem [shape: bf16[2,32], index: 0, kind: input, shape index: {}]
  %s1 = inlined_call_operand.vmem [shape: bf16[32,32], index: 1, kind: input, shape index: {}]
  %s2 = inlined_call_operand.vmem [shape: f32[1,32], index: 2, kind: input, shape index: {}]
  %s3 = inlined_call_operand.vmem [shape: bf16[32,128], index: 3, kind: input, shape index: {}]
  %s4 = inlined_call_operand.vmem [shape: f32[1,128], index: 4, kind: input, shape index: {}]
  %s5 = inlined_call_operand.hbm [shape: f32[2,128], index: 5, kind: output, shape index: {}]
  %s6 = sld [smem:[#allocation0]]
  $region30: #{forward.7} parent=0
    _
  %s8 = ssub.s32 1, %s6
  %s9 = scalar_select 0, %s8, %s6
  $region1: #{forward.7} parent=0
    #allocation2 [shape = 'u8[1024]{0}', space=vmem, size = 0x400, scoped, tag = 'output window, operand 0, single buffered']
    #allocation3 [shape = 's32[1]{0}', space=sflag, size = 0x4, scoped, tag = 'scoped memory for forward.7']
    %10 = vsyncpa [#allocation3], 0
    // Predicated region
    $region2: #{forward.7} parent=1 // pred_check
      _
    $region3: #{forward.7} parent=1 // pred_check_branch
      %12 = sbr.rel (0) target = $region5
    $region4: #{forward.7} parent=1 // pred_region
      _
    $region5: #{forward.7} parent=1 // pred_fallthru
      _
    // Predicated region
    $region6: #{forward.7} parent=1 // pred_check
      _
    $region7: #{forward.7} parent=1 // pred_check_branch
      %14 = sbr.rel (0) target = $region9
    $region8: #{forward.7} parent=1 // pred_region
      _
    $region9: #{forward.7} parent=1 // pred_fallthru
      _
    // Predicated region
    $region10: #{forward.7} parent=1 // pred_check
      _
    $region11: #{forward.7} parent=1 // pred_check_branch
      %16 = sbr.rel (0) target = $region13
    $region12: #{forward.7} parent=1 // pred_region
      _
    $region13: #{forward.7} parent=1 // pred_fallthru
      _
    // Predicated region
    $region14: #{forward.7} parent=1 // pred_check
      _
    $region15: #{forward.7} parent=1 // pred_check_branch
      %18 = sbr.rel (0) target = $region17
    $region16: #{forward.7} parent=1 // pred_region
      _
    $region17: #{forward.7} parent=1 // pred_fallthru
      _
    // Predicated region
    $region18: #{forward.7} parent=1 // pred_check
      _
    $region19: #{forward.7} parent=1 // pred_check_branch
      %20 = sbr.rel (0) target = $region21
    $region20: #{forward.7} parent=1 // pred_region
      _
    $region21: #{forward.7} parent=1 // pred_fallthru
      _
    %v22 = vld [vmem:[%s0] sm:$0x1]
    %v23 = vld [vmem:[%s1] sm:$0xf]
    %v24 = vld [vmem:[%s1 + $0x4] sm:$0xf]
    %v25 = vld [vmem:[%s1 + $0x8] sm:$0xf]
    %v26 = vld [vmem:[%s1 + $0xc] sm:$0xf]
    %v27 = vld [vmem:[%s2] sm:$0x1]
    %v29 = vlaneseq
    %v30 = vshrl.u32 %v29, 7
    %v31 = vsub.s32 0, %v30
    %v32 = vrot.slane %v27, %v31
    %v38 = vunpack.c.l.b16 %v23
    %v39 = vunpack.c.l.b16 %v24
    %v40 = vunpack.c.l.b16 %v25
    %v41 = vunpack.c.l.b16 %v26
    %v42 = vpack.c.b16 %v39, %v38
    %v43 = vpack.c.b16 %v41, %v40
    %vm46 = vcmask 261120
    %v48 = vsel %vm46, %v22, 0
    %50 = vmatprep.subr.bf16.mxu0 0
    %51 = vmatpush1.bf16.msra.mxu0 0
    %52 = vmatprep.subr.bf16.mxu0 0
    %53 = vmatpush1.bf16.msra.mxu0 0
    %54 = vmatprep.subr.bf16.mxu0 0
    %55 = vmatpush1.bf16.msra.mxu0 0
    %56 = vmatprep.subr.bf16.mxu0 0
    %57 = vmatpush1.bf16.msra.mxu0 0
    %58 = vmatprep.subr.bf16.mxu0 0
    %59 = vmatpush1.bf16.msra.mxu0 0
    %60 = vmatprep.subr.bf16.mxu0 0
    %61 = vmatpush1.bf16.msra.mxu0 0
    %62 = vmatprep.subr.bf16.mxu0 0
    %63 = vmatpush1.bf16.msra.mxu0 %v43
    %64 = vmatprep.subr.bf16.mxu0 0
    %65 = vmatpush1.bf16.msra.mxu0 %v42
    %66 = vmatprep.subr.bf16.mxu0 0
    %67 = vmatpush2.bf16.msra.mxu0 0
    %68 = vmatprep.subr.bf16.mxu0 0
    %69 = vmatpush2.bf16.msra.mxu0 0
    %70 = vmatprep.subr.bf16.mxu0 0
    %71 = vmatpush2.bf16.msra.mxu0 0
    %72 = vmatprep.subr.bf16.mxu0 0
    %73 = vmatpush2.bf16.msra.mxu0 0
    %74 = vmatprep.subr.bf16.mxu0 0
    %75 = vmatpush2.bf16.msra.mxu0 0
    %76 = vmatprep.subr.bf16.mxu0 0
    %77 = vmatpush2.bf16.msra.mxu0 0
    %78 = vmatprep.subr.bf16.mxu0 0
    %79 = vmatpush2.bf16.msra.mxu0 0
    %80 = vmatprep.subr.bf16.mxu0 0
    %81 = vmatpush2.bf16.msra.mxu0 0
    %82 = vmatprep.mubr.bf16.mxu0 0
    %83 = vmatmul.mubr.bf16.gmra.mxu0 %v48
    %v84 = vpop.f32.mrf.mxu0
    %v85 = vadd.f32 %v32, %v84
    %v86 = vpop.f32.mrf.mxu0
    %v87 = vpop.f32.mrf.mxu0
    %v88 = vpop.f32.mrf.mxu0
    %89 = vdwg.mxu0
    %v90 = vtanh.pop %v85
    %v91 = vpack.c.bf16 %v90, %v90
    %v92 = vld [vmem:[%s3] sm:$0xf]
    %v93 = vld [vmem:[%s3 + $0x4] sm:$0xf]
    %v94 = vld [vmem:[%s3 + $0x8] sm:$0xf]
    %v95 = vld [vmem:[%s3 + $0xc] sm:$0xf]
    %v96 = vld [vmem:[%s4] sm:$0x1]
    %v98 = vlaneseq
    %v99 = vshrl.u32 %v98, 7
    %v100 = vsub.s32 0, %v99
    %v101 = vrot.slane %v96, %v100
    %v107 = vunpack.c.l.b16 %v92
    %v108 = vunpack.c.l.b16 %v93
    %v109 = vunpack.c.l.b16 %v94
    %v110 = vunpack.c.l.b16 %v95
    %v111 = vpack.c.b16 %v108, %v107
    %v112 = vpack.c.b16 %v110, %v109
    %v116 = vsel %vm46, %v91, 0
    %118 = vmatprep.subr.bf16.mxu0 0
    %119 = vmatpush1.bf16.msra.mxu0 0
    %120 = vmatprep.subr.bf16.mxu0 0
    %121 = vmatpush1.bf16.msra.mxu0 0
    %122 = vmatprep.subr.bf16.mxu0 0
    %123 = vmatpush1.bf16.msra.mxu0 0
    %124 = vmatprep.subr.bf16.mxu0 0
    %125 = vmatpush1.bf16.msra.mxu0 0
    %126 = vmatprep.subr.bf16.mxu0 0
    %127 = vmatpush1.bf16.msra.mxu0 0
    %128 = vmatprep.subr.bf16.mxu0 0
    %129 = vmatpush1.bf16.msra.mxu0 0
    %130 = vmatprep.subr.bf16.mxu0 0
    %131 = vmatpush1.bf16.msra.mxu0 %v112
    %132 = vmatprep.subr.bf16.mxu0 0
    %133 = vmatpush1.bf16.msra.mxu0 %v111
    %134 = vmatprep.subr.bf16.mxu0 0
    %135 = vmatpush2.bf16.msra.mxu0 0
    %136 = vmatprep.subr.bf16.mxu0 0
    %137 = vmatpush2.bf16.msra.mxu0 0
    %138 = vmatprep.subr.bf16.mxu0 0
    %139 = vmatpush2.bf16.msra.mxu0 0
    %140 = vmatprep.subr.bf16.mxu0 0
    %141 = vmatpush2.bf16.msra.mxu0 0
    %142 = vmatprep.subr.bf16.mxu0 0
    %143 = vmatpush2.bf16.msra.mxu0 0
    %144 = vmatprep.subr.bf16.mxu0 0
    %145 = vmatpush2.bf16.msra.mxu0 0
    %146 = vmatprep.subr.bf16.mxu0 0
    %147 = vmatpush2.bf16.msra.mxu0 0
    %148 = vmatprep.subr.bf16.mxu0 0
    %149 = vmatpush2.bf16.msra.mxu0 0
    %150 = vmatprep.mubr.bf16.mxu0 0
    %151 = vmatmul.mubr.bf16.gmra.mxu0 %v116
    %v152 = vpop.f32.mrf.mxu0
    %v153 = vadd.f32 %v101, %v152
    %v154 = vpop.f32.mrf.mxu0
    %v155 = vpop.f32.mrf.mxu0
    %v156 = vpop.f32.mrf.mxu0
    %157 = vdwg.mxu0
    %158 = vst [vmem:[#allocation2] sm:$0x3] %v153
    // Predicated region
    $region22: #{forward.7} parent=1 // pred_check
      _
    $region23: #{forward.7} parent=1 // pred_check_branch
      %160 = sbr.rel (0) target = $region25
    $region24: #{forward.7} parent=1 // pred_region
      %s162 = ssub.s32 32, 32
      %163 = vsyncadd [#allocation3], %s162
      %s165 = sshll.u32 [#allocation2], 4
      %s166 = int_to_ptr.vmem [resolvable:$true] %s165
      %168 = dma.vmem_to_hbm [thread:$0]  %s166, 32, %s5, [#allocation3]
    $region25: #{forward.7} parent=1 // pred_fallthru
      _
    // Predicated region
    $region26: #{forward.7} parent=1 // pred_check
      _
    $region27: #{forward.7} parent=1 // pred_check_branch
      %170 = sbr.rel (0) target = $region29
    $region28: #{forward.7} parent=1 // pred_region
      %171 = dma.done [#allocation3], 32
    $region29: #{forward.7} parent=1 // pred_fallthru
      _
    %172 = vsyncpa [#allocation3], 1

// kernel: forward.5
$region0: #{forward.5}
  #allocation0 [shape = 'u32[]', space=smem, size = 0x4, offset = 0x4, fixed_abs, tag = 'smem constant byte address 0x4 - core index']
  #allocation1 [shape = 'u32[144,128]{1,0:T(1,128)}', space=vmem, size = 0x12000, scoped, tag = 'internal scratch']
  #allocation2 [shape = 'bf16[8,32]{1,0:T(8,128)(2,1)}', space=vmem, size = 0x800, scoped, tag = 'scratch operand']
  %s0 = inlined_call_operand.vmem [shape: bf16[2,8,32], index: 0, kind: input, shape index: {}, may-alias: {0,14}]
  %s1 = inlined_call_operand.vmem [shape: f32[2,1,8], index: 1, kind: input, shape index: {}]
  %s2 = inlined_call_operand.vmem [shape: bf16[32,96], index: 2, kind: input, shape index: {}]
  %s3 = inlined_call_operand.vmem [shape: f32[1,96], index: 3, kind: input, shape index: {}]
  %s4 = inlined_call_operand.vmem [shape: bf16[32,32], index: 4, kind: input, shape index: {}]
  %s5 = inlined_call_operand.vmem [shape: f32[1,32], index: 5, kind: input, shape index: {}]
  %s6 = inlined_call_operand.vmem [shape: f32[1,32], index: 6, kind: input, shape index: {}]
  %s7 = inlined_call_operand.vmem [shape: f32[1,32], index: 7, kind: input, shape index: {}]
  %s8 = inlined_call_operand.vmem [shape: bf16[32,64], index: 8, kind: input, shape index: {}]
  %s9 = inlined_call_operand.vmem [shape: f32[1,64], index: 9, kind: input, shape index: {}]
  %s10 = inlined_call_operand.vmem [shape: bf16[64,32], index: 10, kind: input, shape index: {}]
  %s11 = inlined_call_operand.vmem [shape: f32[1,32], index: 11, kind: input, shape index: {}]
  %s12 = inlined_call_operand.vmem [shape: f32[1,32], index: 12, kind: input, shape index: {}]
  %s13 = inlined_call_operand.vmem [shape: f32[1,32], index: 13, kind: input, shape index: {}]
  %s14 = inlined_call_operand.vmem [shape: bf16[2,8,32], index: 14, kind: output, shape index: {}, may-alias: {0,14}]
  %s15 = sld [smem:[#allocation0]]
  $region89: #{forward.5} parent=0
    _
  %s17 = ssub.s32 1, %s15
  %s18 = scalar_select 0, %s17, %s15
  loop: start=0, step=1, limit=4
  $region2: #{forward.5} parent=0 // loop_pre_header
    _
  $region3: #{forward.5} parent=0 // loop_header
    %s20 = sphi 0, %s24
    %p21 = scmp.ge.s32.totalorder %s20, 4
    %s30 = sphi 0, %s32
    %s33 = sphi 0, %s30
    %s34 = sphi 0, %s33
    %s50 = sphi 0, %s34
    %s56 = sphi 0, %s58
    %s59 = sphi 0, %s56
    %s60 = sphi 0, %s59
    %s76 = sphi 0, %s60
    %s80 = sphi 0, %s80
    %s82 = sphi 0, %s80
    %s83 = sphi 0, %s82
    %s97 = sphi 0, %s83
    %s101 = sphi 0, %s101
    %s103 = sphi 0, %s101
    %s104 = sphi 0, %s103
    %s118 = sphi 0, %s104
    %s122 = sphi 0, %s122
    %s124 = sphi 0, %s122
    %s125 = sphi 0, %s124
    %s139 = sphi 0, %s125
    %s143 = sphi 0, %s143
    %s145 = sphi 0, %s143
    %s146 = sphi 0, %s145
    %s160 = sphi 0, %s146
    %s164 = sphi 0, %s164
    %s166 = sphi 0, %s164
    %s167 = sphi 0, %s166
    %s181 = sphi 0, %s167
    %s185 = sphi 0, %s185
    %s187 = sphi 0, %s185
    %s188 = sphi 0, %s187
    %s202 = sphi 0, %s188
    %s206 = sphi 0, %s206
    %s208 = sphi 0, %s206
    %s209 = sphi 0, %s208
    %s223 = sphi 0, %s209
    %s227 = sphi 0, %s227
    %s229 = sphi 0, %s227
    %s230 = sphi 0, %s229
    %s244 = sphi 0, %s230
    %s248 = sphi 0, %s248
    %s250 = sphi 0, %s248
    %s251 = sphi 0, %s250
    %s265 = sphi 0, %s251
    %s269 = sphi 0, %s269
    %s271 = sphi 0, %s269
    %s272 = sphi 0, %s271
    %s286 = sphi 0, %s272
    %s290 = sphi 0, %s290
    %s292 = sphi 0, %s290
    %s293 = sphi 0, %s292
    %s307 = sphi 0, %s293
    %s311 = sphi 0, %s311
    %s313 = sphi 0, %s311
    %s314 = sphi 0, %s313
    %s328 = sphi 0, %s314
    %s334 = sphi 0, %s336
    %s337 = sphi 0, %s334
    %s338 = sphi 0, %s337
    %s354 = sphi 0, %s338
  $region4: #{forward.5} parent=0 // loop_header_branch
    %23 = sbr.rel (%p21) target = $region8
  $region5: #{forward.5} parent=0 // loop_body
    %s25 = ssub.s32 %s20, 1
    %s26 = ssub.s32 %s20, 2
    %s27 = sadd.s32 %s20, 1
    %s28 = ssub.s32 %s20, %s27
    %p29 = scmp.eq.s32.totalorder %s28, 0
    %s31 = sadd.s32 %s30, 1
    %s32 = scalar_select %p29, %s30, %s31
    %p35 = pneg %p29
    %p36 = scmp.eq.s32.totalorder %s20, 1
    %p37 = por %p35, %p36
    %p38 = scmp.ne.s32.totalorder %s30, %s33
    %p39 = scmp.eq.s32.totalorder %s20, 0
    %p40 = por %p38, %p39
    %p41 = scmp.ne.s32.totalorder %s30, %s33
    %p42 = scmp.eq.s32.totalorder %s25, 1
    %p43 = por %p41, %p42
    %p44 = scmp.ne.s32.totalorder %s33, %s34
    %p45 = scmp.eq.s32.totalorder %s25, 0
    %p46 = por %p44, %p45
    %p47 = scmp.ne.s32.totalorder %s33, %s34
    %p48 = scmp.eq.s32.totalorder %s26, 1
    %p49 = por %p47, %p48
    %p51 = scmp.ne.s32.totalorder %s34, %s50
    %p52 = scmp.eq.s32.totalorder %s26, 0
    %p53 = por %p51, %p52
    %s54 = ssub.s32 %s20, %s27
    %p55 = scmp.eq.s32.totalorder %s54, 0
    %s57 = sadd.s32 %s56, 1
    %s58 = scalar_select %p55, %s56, %s57
    %p61 = pneg %p55
    %p62 = scmp.eq.s32.totalorder %s20, 1
    %p63 = por %p61, %p62
    %p64 = scmp.ne.s32.totalorder %s56, %s59
    %p65 = scmp.eq.s32.totalorder %s20, 0
    %p66 = por %p64, %p65
    %p67 = scmp.ne.s32.totalorder %s56, %s59
    %p68 = scmp.eq.s32.totalorder %s25, 1
    %p69 = por %p67, %p68
    %p70 = scmp.ne.s32.totalorder %s59, %s60
    %p71 = scmp.eq.s32.totalorder %s25, 0
    %p72 = por %p70, %p71
    %p73 = scmp.ne.s32.totalorder %s59, %s60
    %p74 = scmp.eq.s32.totalorder %s26, 1
    %p75 = por %p73, %p74
    %p77 = scmp.ne.s32.totalorder %s60, %s76
    %p78 = scmp.eq.s32.totalorder %s26, 0
    %p79 = por %p77, %p78
    %s81 = sadd.s32 %s80, 1
    %p84 = scmp.eq.s32.totalorder %s20, 1
    %p85 = scmp.ne.s32.totalorder %s80, %s82
    %p86 = scmp.eq.s32.totalorder %s20, 0
    %p87 = por %p85, %p86
    %p88 = scmp.ne.s32.totalorder %s80, %s82
    %p89 = scmp.eq.s32.totalorder %s25, 1
    %p90 = por %p88, %p89
    %p91 = scmp.ne.s32.totalorder %s82, %s83
    %p92 = scmp.eq.s32.totalorder %s25, 0
    %p93 = por %p91, %p92
    %p94 = scmp.ne.s32.totalorder %s82, %s83
    %p95 = scmp.eq.s32.totalorder %s26, 1
    %p96 = por %p94, %p95
    %p98 = scmp.ne.s32.totalorder %s83, %s97
    %p99 = scmp.eq.s32.totalorder %s26, 0
    %p100 = por %p98, %p99
    %s102 = sadd.s32 %s101, 1
    %p105 = scmp.eq.s32.totalorder %s20, 1
    %p106 = scmp.ne.s32.totalorder %s101, %s103
    %p107 = scmp.eq.s32.totalorder %s20, 0
    %p108 = por %p106, %p107
    %p109 = scmp.ne.s32.totalorder %s101, %s103
    %p110 = scmp.eq.s32.totalorder %s25, 1
    %p111 = por %p109, %p110
    %p112 = scmp.ne.s32.totalorder %s103, %s104
    %p113 = scmp.eq.s32.totalorder %s25, 0
    %p114 = por %p112, %p113
    %p115 = scmp.ne.s32.totalorder %s103, %s104
    %p116 = scmp.eq.s32.totalorder %s26, 1
    %p117 = por %p115, %p116
    %p119 = scmp.ne.s32.totalorder %s104, %s118
    %p120 = scmp.eq.s32.totalorder %s26, 0
    %p121 = por %p119, %p120
    %s123 = sadd.s32 %s122, 1
    %p126 = scmp.eq.s32.totalorder %s20, 1
    %p127 = scmp.ne.s32.totalorder %s122, %s124
    %p128 = scmp.eq.s32.totalorder %s20, 0
    %p129 = por %p127, %p128
    %p130 = scmp.ne.s32.totalorder %s122, %s124
    %p131 = scmp.eq.s32.totalorder %s25, 1
    %p132 = por %p130, %p131
    %p133 = scmp.ne.s32.totalorder %s124, %s125
    %p134 = scmp.eq.s32.totalorder %s25, 0
    %p135 = por %p133, %p134
    %p136 = scmp.ne.s32.totalorder %s124, %s125
    %p137 = scmp.eq.s32.totalorder %s26, 1
    %p138 = por %p136, %p137
    %p140 = scmp.ne.s32.totalorder %s125, %s139
    %p141 = scmp.eq.s32.totalorder %s26, 0
    %p142 = por %p140, %p141
    %s144 = sadd.s32 %s143, 1
    %p147 = scmp.eq.s32.totalorder %s20, 1
    %p148 = scmp.ne.s32.totalorder %s143, %s145
    %p149 = scmp.eq.s32.totalorder %s20, 0
    %p150 = por %p148, %p149
    %p151 = scmp.ne.s32.totalorder %s143, %s145
    %p152 = scmp.eq.s32.totalorder %s25, 1
    %p153 = por %p151, %p152
    %p154 = scmp.ne.s32.totalorder %s145, %s146
    %p155 = scmp.eq.s32.totalorder %s25, 0
    %p156 = por %p154, %p155
    %p157 = scmp.ne.s32.totalorder %s145, %s146
    %p158 = scmp.eq.s32.totalorder %s26, 1
    %p159 = por %p157, %p158
    %p161 = scmp.ne.s32.totalorder %s146, %s160
    %p162 = scmp.eq.s32.totalorder %s26, 0
    %p163 = por %p161, %p162
    %s165 = sadd.s32 %s164, 1
    %p168 = scmp.eq.s32.totalorder %s20, 1
    %p169 = scmp.ne.s32.totalorder %s164, %s166
    %p170 = scmp.eq.s32.totalorder %s20, 0
    %p171 = por %p169, %p170
    %p172 = scmp.ne.s32.totalorder %s164, %s166
    %p173 = scmp.eq.s32.totalorder %s25, 1
    %p174 = por %p172, %p173
    %p175 = scmp.ne.s32.totalorder %s166, %s167
    %p176 = scmp.eq.s32.totalorder %s25, 0
    %p177 = por %p175, %p176
    %p178 = scmp.ne.s32.totalorder %s166, %s167
    %p179 = scmp.eq.s32.totalorder %s26, 1
    %p180 = por %p178, %p179
    %p182 = scmp.ne.s32.totalorder %s167, %s181
    %p183 = scmp.eq.s32.totalorder %s26, 0
    %p184 = por %p182, %p183
    %s186 = sadd.s32 %s185, 1
    %p189 = scmp.eq.s32.totalorder %s20, 1
    %p190 = scmp.ne.s32.totalorder %s185, %s187
    %p191 = scmp.eq.s32.totalorder %s20, 0
    %p192 = por %p190, %p191
    %p193 = scmp.ne.s32.totalorder %s185, %s187
    %p194 = scmp.eq.s32.totalorder %s25, 1
    %p195 = por %p193, %p194
    %p196 = scmp.ne.s32.totalorder %s187, %s188
    %p197 = scmp.eq.s32.totalorder %s25, 0
    %p198 = por %p196, %p197
    %p199 = scmp.ne.s32.totalorder %s187, %s188
    %p200 = scmp.eq.s32.totalorder %s26, 1
    %p201 = por %p199, %p200
    %p203 = scmp.ne.s32.totalorder %s188, %s202
    %p204 = scmp.eq.s32.totalorder %s26, 0
    %p205 = por %p203, %p204
    %s207 = sadd.s32 %s206, 1
    %p210 = scmp.eq.s32.totalorder %s20, 1
    %p211 = scmp.ne.s32.totalorder %s206, %s208
    %p212 = scmp.eq.s32.totalorder %s20, 0
    %p213 = por %p211, %p212
    %p214 = scmp.ne.s32.totalorder %s206, %s208
    %p215 = scmp.eq.s32.totalorder %s25, 1
    %p216 = por %p214, %p215
    %p217 = scmp.ne.s32.totalorder %s208, %s209
    %p218 = scmp.eq.s32.totalorder %s25, 0
    %p219 = por %p217, %p218
    %p220 = scmp.ne.s32.totalorder %s208, %s209
    %p221 = scmp.eq.s32.totalorder %s26, 1
    %p222 = por %p220, %p221
    %p224 = scmp.ne.s32.totalorder %s209, %s223
    %p225 = scmp.eq.s32.totalorder %s26, 0
    %p226 = por %p224, %p225
    %s228 = sadd.s32 %s227, 1
    %p231 = scmp.eq.s32.totalorder %s20, 1
    %p232 = scmp.ne.s32.totalorder %s227, %s229
    %p233 = scmp.eq.s32.totalorder %s20, 0
    %p234 = por %p232, %p233
    %p235 = scmp.ne.s32.totalorder %s227, %s229
    %p236 = scmp.eq.s32.totalorder %s25, 1
    %p237 = por %p235, %p236
    %p238 = scmp.ne.s32.totalorder %s229, %s230
    %p239 = scmp.eq.s32.totalorder %s25, 0
    %p240 = por %p238, %p239
    %p241 = scmp.ne.s32.totalorder %s229, %s230
    %p242 = scmp.eq.s32.totalorder %s26, 1
    %p243 = por %p241, %p242
    %p245 = scmp.ne.s32.totalorder %s230, %s244
    %p246 = scmp.eq.s32.totalorder %s26, 0
    %p247 = por %p245, %p246
    %s249 = sadd.s32 %s248, 1
    %p252 = scmp.eq.s32.totalorder %s20, 1
    %p253 = scmp.ne.s32.totalorder %s248, %s250
    %p254 = scmp.eq.s32.totalorder %s20, 0
    %p255 = por %p253, %p254
    %p256 = scmp.ne.s32.totalorder %s248, %s250
    %p257 = scmp.eq.s32.totalorder %s25, 1
    %p258 = por %p256, %p257
    %p259 = scmp.ne.s32.totalorder %s250, %s251
    %p260 = scmp.eq.s32.totalorder %s25, 0
    %p261 = por %p259, %p260
    %p262 = scmp.ne.s32.totalorder %s250, %s251
    %p263 = scmp.eq.s32.totalorder %s26, 1
    %p264 = por %p262, %p263
    %p266 = scmp.ne.s32.totalorder %s251, %s265
    %p267 = scmp.eq.s32.totalorder %s26, 0
    %p268 = por %p266, %p267
    %s270 = sadd.s32 %s269, 1
    %p273 = scmp.eq.s32.totalorder %s20, 1
    %p274 = scmp.ne.s32.totalorder %s269, %s271
    %p275 = scmp.eq.s32.totalorder %s20, 0
    %p276 = por %p274, %p275
    %p277 = scmp.ne.s32.totalorder %s269, %s271
    %p278 = scmp.eq.s32.totalorder %s25, 1
    %p279 = por %p277, %p278
    %p280 = scmp.ne.s32.totalorder %s271, %s272
    %p281 = scmp.eq.s32.totalorder %s25, 0
    %p282 = por %p280, %p281
    %p283 = scmp.ne.s32.totalorder %s271, %s272
    %p284 = scmp.eq.s32.totalorder %s26, 1
    %p285 = por %p283, %p284
    %p287 = scmp.ne.s32.totalorder %s272, %s286
    %p288 = scmp.eq.s32.totalorder %s26, 0
    %p289 = por %p287, %p288
    %s291 = sadd.s32 %s290, 1
    %p294 = scmp.eq.s32.totalorder %s20, 1
    %p295 = scmp.ne.s32.totalorder %s290, %s292
    %p296 = scmp.eq.s32.totalorder %s20, 0
    %p297 = por %p295, %p296
    %p298 = scmp.ne.s32.totalorder %s290, %s292
    %p299 = scmp.eq.s32.totalorder %s25, 1
    %p300 = por %p298, %p299
    %p301 = scmp.ne.s32.totalorder %s292, %s293
    %p302 = scmp.eq.s32.totalorder %s25, 0
    %p303 = por %p301, %p302
    %p304 = scmp.ne.s32.totalorder %s292, %s293
    %p305 = scmp.eq.s32.totalorder %s26, 1
    %p306 = por %p304, %p305
    %p308 = scmp.ne.s32.totalorder %s293, %s307
    %p309 = scmp.eq.s32.totalorder %s26, 0
    %p310 = por %p308, %p309
    %s312 = sadd.s32 %s311, 1
    %p315 = scmp.eq.s32.totalorder %s20, 1
    %p316 = scmp.ne.s32.totalorder %s311, %s313
    %p317 = scmp.eq.s32.totalorder %s20, 0
    %p318 = por %p316, %p317
    %p319 = scmp.ne.s32.totalorder %s311, %s313
    %p320 = scmp.eq.s32.totalorder %s25, 1
    %p321 = por %p319, %p320
    %p322 = scmp.ne.s32.totalorder %s313, %s314
    %p323 = scmp.eq.s32.totalorder %s25, 0
    %p324 = por %p322, %p323
    %p325 = scmp.ne.s32.totalorder %s313, %s314
    %p326 = scmp.eq.s32.totalorder %s26, 1
    %p327 = por %p325, %p326
    %p329 = scmp.ne.s32.totalorder %s314, %s328
    %p330 = scmp.eq.s32.totalorder %s26, 0
    %p331 = por %p329, %p330
    %s332 = ssub.s32 %s20, %s27
    %p333 = scmp.eq.s32.totalorder %s332, 0
    %s335 = sadd.s32 %s334, 1
    %s336 = scalar_select %p333, %s334, %s335
    %p339 = pneg %p333
    %p340 = scmp.eq.s32.totalorder %s20, 1
    %p341 = por %p339, %p340
    %p342 = scmp.ne.s32.totalorder %s334, %s337
    %p343 = scmp.eq.s32.totalorder %s20, 0
    %p344 = por %p342, %p343
    %p345 = scmp.ne.s32.totalorder %s334, %s337
    %p346 = scmp.eq.s32.totalorder %s25, 1
    %p347 = por %p345, %p346
    %p348 = scmp.ne.s32.totalorder %s337, %s338
    %p349 = scmp.eq.s32.totalorder %s25, 0
    %p350 = por %p348, %p349
    %p351 = scmp.ne.s32.totalorder %s337, %s338
    %p352 = scmp.eq.s32.totalorder %s26, 1
    %p353 = por %p351, %p352
    %p355 = scmp.ne.s32.totalorder %s338, %s354
    %p356 = scmp.eq.s32.totalorder %s26, 0
    %p357 = por %p355, %p356
    %p358 = scmp.le.s32.totalorder 1, %s20
    %p359 = scmp.lt.s32.totalorder %s20, 3
    %p360 = pnand %p358, %p359
    %p361 = pneg %p360
    // Predicated region
    $region9: #{forward.5} parent=5 // pred_check
      _
    $region10: #{forward.5} parent=5 // pred_check_branch
      %363 = sbr.rel (%p360) target = $region12
    $region11: #{forward.5} parent=5 // pred_region
      %s364 = ssub.s32 %s20, 1
      // Predicated region
      $region13: #{forward.5} parent=11 // pred_check
        %p365 = pneg %p93
      $region14: #{forward.5} parent=11 // pred_check_branch
        %367 = sbr.rel (%p365) target = $region16
      $region15: #{forward.5} parent=11 // pred_region
        _
      $region16: #{forward.5} parent=11 // pred_fallthru
        _
      // Predicated region
      $region17: #{forward.5} parent=11 // pred_check
        %p368 = pneg %p114
      $region18: #{forward.5} parent=11 // pred_check_branch
        %370 = sbr.rel (%p368) target = $region20
      $region19: #{forward.5} parent=11 // pred_region
        _
      $region20: #{forward.5} parent=11 // pred_fallthru
        _
      // Predicated region
      $region21: #{forward.5} parent=11 // pred_check
        %p371 = pneg %p135
      $region22: #{forward.5} parent=11 // pred_check_branch
        %373 = sbr.rel (%p371) target = $region24
      $region23: #{forward.5} parent=11 // pred_region
        _
      $region24: #{forward.5} parent=11 // pred_fallthru
        _
      // Predicated region
      $region25: #{forward.5} parent=11 // pred_check
        %p374 = pneg %p156
      $region26: #{forward.5} parent=11 // pred_check_branch
        %376 = sbr.rel (%p374) target = $region28
      $region27: #{forward.5} parent=11 // pred_region
        _
      $region28: #{forward.5} parent=11 // pred_fallthru
        _
      // Predicated region
      $region29: #{forward.5} parent=11 // pred_check
        %p377 = pneg %p177
      $region30: #{forward.5} parent=11 // pred_check_branch
        %379 = sbr.rel (%p377) target = $region32
      $region31: #{forward.5} parent=11 // pred_region
        _
      $region32: #{forward.5} parent=11 // pred_fallthru
        _
      // Predicated region
      $region33: #{forward.5} parent=11 // pred_check
        %p380 = pneg %p198
      $region34: #{forward.5} parent=11 // pred_check_branch
        %382 = sbr.rel (%p380) target = $region36
      $region35: #{forward.5} parent=11 // pred_region
        _
      $region36: #{forward.5} parent=11 // pred_fallthru
        _
      // Predicated region
      $region37: #{forward.5} parent=11 // pred_check
        %p383 = pneg %p219
      $region38: #{forward.5} parent=11 // pred_check_branch
        %385 = sbr.rel (%p383) target = $region40
      $region39: #{forward.5} parent=11 // pred_region
        _
      $region40: #{forward.5} parent=11 // pred_fallthru
        _
      // Predicated region
      $region41: #{forward.5} parent=11 // pred_check
        %p386 = pneg %p240
      $region42: #{forward.5} parent=11 // pred_check_branch
        %388 = sbr.rel (%p386) target = $region44
      $region43: #{forward.5} parent=11 // pred_region
        _
      $region44: #{forward.5} parent=11 // pred_fallthru
        _
      // Predicated region
      $region45: #{forward.5} parent=11 // pred_check
        %p389 = pneg %p261
      $region46: #{forward.5} parent=11 // pred_check_branch
        %391 = sbr.rel (%p389) target = $region48
      $region47: #{forward.5} parent=11 // pred_region
        _
      $region48: #{forward.5} parent=11 // pred_fallthru
        _
      // Predicated region
      $region49: #{forward.5} parent=11 // pred_check
        %p392 = pneg %p282
      $region50: #{forward.5} parent=11 // pred_check_branch
        %394 = sbr.rel (%p392) target = $region52
      $region51: #{forward.5} parent=11 // pred_region
        _
      $region52: #{forward.5} parent=11 // pred_fallthru
        _
      // Predicated region
      $region53: #{forward.5} parent=11 // pred_check
        %p395 = pneg %p303
      $region54: #{forward.5} parent=11 // pred_check_branch
        %397 = sbr.rel (%p395) target = $region56
      $region55: #{forward.5} parent=11 // pred_region
        _
      $region56: #{forward.5} parent=11 // pred_fallthru
        _
      // Predicated region
      $region57: #{forward.5} parent=11 // pred_check
        %p398 = pneg %p324
      $region58: #{forward.5} parent=11 // pred_check_branch
        %400 = sbr.rel (%p398) target = $region60
      $region59: #{forward.5} parent=11 // pred_region
        _
      $region60: #{forward.5} parent=11 // pred_fallthru
        _
    $region12: #{forward.5} parent=5 // pred_fallthru
      _
    %p401 = scmp.lt.s32.totalorder %s20, 2
    // Predicated region
    $region61: #{forward.5} parent=5 // pred_check
      %p402 = pneg %p401
    $region62: #{forward.5} parent=5 // pred_check_branch
      %404 = sbr.rel (%p402) target = $region64
    $region63: #{forward.5} parent=5 // pred_region
      // Predicated region
      $region65: #{forward.5} parent=63 // pred_check
        %p405 = pneg %p40
      $region66: #{forward.5} parent=63 // pred_check_branch
        %407 = sbr.rel (%p405) target = $region68
      $region67: #{forward.5} parent=63 // pred_region
        %p408 = scmp.lt.s32.totalorder %s20, 1
        %s409 = scalar_select %p408, %s20, 1
        %s410 = smul.addr %s409, 4
        %s411 = scalar_lea.vmem %s0, %s410
      $region68: #{forward.5} parent=63 // pred_fallthru
        _
      // Predicated region
      $region69: #{forward.5} parent=63 // pred_check
        %p412 = pneg %p66
      $region70: #{forward.5} parent=63 // pred_check_branch
        %414 = sbr.rel (%p412) target = $region72
      $region71: #{forward.5} parent=63 // pred_region
        %p415 = scmp.lt.s32.totalorder %s20, 1
        %s416 = scalar_select %p415, %s20, 1
        %s417 = scalar_lea.vmem %s1, %s416
      $region72: #{forward.5} parent=63 // pred_fallthru
        _
    $region64: #{forward.5} parent=5 // pred_fallthru
      _
    %p418 = scmp.le.s32.totalorder 1, %s20
    %p419 = scmp.lt.s32.totalorder %s20, 3
    %p420 = pnand %p418, %p419
    %p421 = pneg %p420
    // Predicated region
    $region73: #{forward.5} parent=5 // pred_check
      _
    $region74: #{forward.5} parent=5 // pred_check_branch
      %423 = sbr.rel (%p420) target = $region76
    $region75: #{forward.5} parent=5 // pred_region
      %s424 = ssub.s32 %s20, 1
      %p425 = scmp.lt.s32.totalorder %s25, 1
      %s426 = scalar_select %p425, %s25, 1
      %s427 = smul.addr %s426, 4
      %s428 = scalar_lea.vmem %s0, %s427
      %p429 = pneg %p46
      %p430 = pneg %p43
      %p431 = scmp.lt.s32.totalorder %s25, 1
      %s432 = scalar_select %p431, %s25, 1
      %s433 = scalar_lea.vmem %s1, %s432
      %p434 = pneg %p72
      %p435 = pneg %p69
      %p436 = pneg %p93
      %p437 = pneg %p90
      %p438 = pneg %p114
      %p439 = pneg %p111
      %p440 = pneg %p135
      %p441 = pneg %p132
      %p442 = pneg %p156
      %p443 = pneg %p153
      %p444 = pneg %p177
      %p445 = pneg %p174
      %p446 = pneg %p198
      %p447 = pneg %p195
      %p448 = pneg %p219
      %p449 = pneg %p216
      %p450 = pneg %p240
      %p451 = pneg %p237
      %p452 = pneg %p261
      %p453 = pneg %p258
      %p454 = pneg %p282
      %p455 = pneg %p279
      %p456 = pneg %p303
      %p457 = pneg %p300
      %p458 = pneg %p324
      %p459 = pneg %p321
      %p460 = pneg %p350
      %p461 = pneg %p347
      %p462 = scmp.lt.s32.totalorder %s25, 1
      %s463 = scalar_select %p462, %s25, 1
      %s464 = smul.addr %s463, 4
      %s465 = scalar_lea.vmem %s14, %s464
      %p466 = scmp.lt.s32.totalorder %s25, 1
      %s467 = scalar_select %p466, %s25, 1
      %s468 = smul.addr %s467, 4
      %s469 = scalar_lea.vmem %s0, %s468
      %p470 = scmp.lt.s32.totalorder %s25, 1
      %s471 = scalar_select %p470, %s25, 1
      %s472 = scalar_lea.vmem %s1, %s471
      %p473 = scmp.lt.s32.totalorder %s25, 1
      %s474 = scalar_select %p473, %s25, 1
      %s475 = smul.addr %s474, 4
      %s476 = scalar_lea.vmem %s14, %s475
      %v478 = vld [vmem:[%s469] sm:$0xf]
      %v479 = vld [vmem:[%s2] sm:$0xf]
      %v480 = vld [vmem:[%s2 + $0x4] sm:$0xf]
      %v481 = vld [vmem:[%s2 + $0x8] sm:$0xf]
      %v482 = vld [vmem:[%s2 + $0xc] sm:$0xf]
      %v483 = vld [vmem:[%s3] sm:$0x1]
      %v485 = vlaneseq
      %v486 = vshrl.u32 %v485, 7
      %v487 = vsub.s32 0, %v486
      %v488 = vrot.slane %v483, %v487
      %v494 = vunpack.c.l.b16 %v479
      %v495 = vunpack.c.l.b16 %v480
      %v496 = vunpack.c.l.b16 %v481
      %v497 = vunpack.c.l.b16 %v482
      %v498 = vpack.c.b16 %v495, %v494
      %v499 = vpack.c.b16 %v497, %v496
      %vm502 = vcmask 261120
      %v504 = vsel %vm502, %v478, 0
      %506 = vmatprep.subr.bf16.mxu0 0
      %507 = vmatpush1.bf16.msra.mxu0 0
      %508 = vmatprep.subr.bf16.mxu0 0
      %509 = vmatpush1.bf16.msra.mxu0 0
      %510 = vmatprep.subr.bf16.mxu0 0
      %511 = vmatpush1.bf16.msra.mxu0 0
      %512 = vmatprep.subr.bf16.mxu0 0
      %513 = vmatpush1.bf16.msra.mxu0 0
      %514 = vmatprep.subr.bf16.mxu0 0
      %515 = vmatpush1.bf16.msra.mxu0 0
      %516 = vmatprep.subr.bf16.mxu0 0
      %517 = vmatpush1.bf16.msra.mxu0 0
      %518 = vmatprep.subr.bf16.mxu0 0
      %519 = vmatpush1.bf16.msra.mxu0 %v499
      %520 = vmatprep.subr.bf16.mxu0 0
      %521 = vmatpush1.bf16.msra.mxu0 %v498
      %522 = vmatprep.subr.bf16.mxu0 0
      %523 = vmatpush2.bf16.msra.mxu0 0
      %524 = vmatprep.subr.bf16.mxu0 0
      %525 = vmatpush2.bf16.msra.mxu0 0
      %526 = vmatprep.subr.bf16.mxu0 0
      %527 = vmatpush2.bf16.msra.mxu0 0
      %528 = vmatprep.subr.bf16.mxu0 0
      %529 = vmatpush2.bf16.msra.mxu0 0
      %530 = vmatprep.subr.bf16.mxu0 0
      %531 = vmatpush2.bf16.msra.mxu0 0
      %532 = vmatprep.subr.bf16.mxu0 0
      %533 = vmatpush2.bf16.msra.mxu0 0
      %534 = vmatprep.subr.bf16.mxu0 0
      %535 = vmatpush2.bf16.msra.mxu0 0
      %536 = vmatprep.subr.bf16.mxu0 0
      %537 = vmatpush2.bf16.msra.mxu0 0
      %538 = vmatprep.mubr.bf16.mxu0 0
      %539 = vmatmul.mubr.bf16.gmra.mxu0 %v504
      %v540 = vpop.f32.mrf.mxu0
      %v541 = vadd.f32 %v488, %v540
      %v542 = vpop.f32.mrf.mxu0
      %v543 = vpop.f32.mrf.mxu0
      %v544 = vpop.f32.mrf.mxu0
      %545 = vdwg.mxu0
      %v546 = vld [vmem:[%s472] sm:$0x1]
      %v548 = vlaneseq
      %v549 = vshrl.u32 %v548, 7
      %v550 = vsub.s32 0, %v549
      %v551 = vrot.slane %v546, %v550
      %v553 = vpack.c.bf16 %v541, %v541
      %555 = vrot.lane.b32.xlu0 %v553, 96
      %v556 = vpop.permute.xlu0 %555
      %vm557 = vcmask 64512
      %v559 = vsel %vm557, %v553, 0
      %v562 = vsel %vm557, %v556, 0
      %564 = vmatprep.subr.bf16.mxu0 0
      %565 = vmatpush1.bf16.xpose.msra.mxu0 0
      %566 = vmatprep.subr.bf16.mxu0 0
      %567 = vmatpush1.bf16.xpose.msra.mxu0 0
      %568 = vmatprep.subr.bf16.mxu0 0
      %569 = vmatpush1.bf16.xpose.msra.mxu0 0
      %570 = vmatprep.subr.bf16.mxu0 0
      %571 = vmatpush1.bf16.xpose.msra.mxu0 0
      %572 = vmatprep.subr.bf16.mxu0 0
      %573 = vmatpush1.bf16.xpose.msra.mxu0 0
      %574 = vmatprep.subr.bf16.mxu0 0
      %575 = vmatpush1.bf16.xpose.msra.mxu0 0
      %576 = vmatprep.subr.bf16.mxu0 0
      %577 = vmatpush1.bf16.xpose.msra.mxu0 0
      %578 = vmatprep.subr.bf16.mxu0 0
      %579 = vmatpush1.bf16.xpose.msra.mxu0 %v562
      %580 = vmatprep.subr.bf16.mxu0 0
      %581 = vmatpush2.bf16.xpose.msra.mxu0 0
      %582 = vmatprep.subr.bf16.mxu0 0
      %583 = vmatpush2.bf16.xpose.msra.mxu0 0
      %584 = vmatprep.subr.bf16.mxu0 0
      %585 = vmatpush2.bf16.xpose.msra.mxu0 0
      %586 = vmatprep.subr.bf16.mxu0 0
      %587 = vmatpush2.bf16.xpose.msra.mxu0 0
      %588 = vmatprep.subr.bf16.mxu0 0
      %589 = vmatpush2.bf16.xpose.msra.mxu0 0
      %590 = vmatprep.subr.bf16.mxu0 0
      %591 = vmatpush2.bf16.xpose.msra.mxu0 0
      %592 = vmatprep.subr.bf16.mxu0 0
      %593 = vmatpush2.bf16.xpose.msra.mxu0 0
      %594 = vmatprep.subr.bf16.mxu0 0
      %595 = vmatpush2.bf16.xpose.msra.mxu0 0
      %596 = vmatprep.mubr.bf16.mxu0 0
      %597 = vmatmul.mubr.bf16.gmra.mxu0 %v559
      %v598 = vpop.f32.mrf.mxu0
      %v599 = vadd.f32 %v551, %v598
      %v600 = vpop.f32.mrf.mxu0
      %v601 = vpop.f32.mrf.mxu0
      %v602 = vpop.f32.mrf.mxu0
      %603 = vdwg.mxu0
      %v604 = vsel %vm557, %v599, -inf
      %605 = vmax.xlane.f32.xlu0 %v604
      %v606 = vpop.xlane.xlu0 %605
      %v607 = vsub.f32 %v599, %v606
      %v608 = vmul.f32 %v607, 1.442695
      %v609 = vpow.pop %v608
      %v610 = vsel %vm557, %v609, 0.0
      %611 = vadd.xlane.f32.xlu0 %v610
      %v612 = vpop.xlane.xlu0 %611
      %v613 = vrcp.pop %v612
      %v614 = vmul.f32 %v609, %v613
      %v615 = vpack.c.bf16 %v614, %v614
      %616 = vrot.lane.b32.xlu0 %v553, 64
      %v617 = vpop.permute.xlu0 %616
      %v619 = vsel %vm557, %v615, 0
      %vm621 = vcmask 1043456
      %v623 = vsel %vm621, %v617, 0
      %625 = vmatprep.subr.bf16.mxu0 0
      %626 = vmatpush1.bf16.msra.mxu0 0
      %627 = vmatprep.subr.bf16.mxu0 0
      %628 = vmatpush1.bf16.msra.mxu0 0
      %629 = vmatprep.subr.bf16.mxu0 0
      %630 = vmatpush1.bf16.msra.mxu0 0
      %631 = vmatprep.subr.bf16.mxu0 0
      %632 = vmatpush1.bf16.msra.mxu0 0
      %633 = vmatprep.subr.bf16.mxu0 0
      %634 = vmatpush1.bf16.msra.mxu0 0
      %635 = vmatprep.subr.bf16.mxu0 0
      %636 = vmatpush1.bf16.msra.mxu0 0
      %637 = vmatprep.subr.bf16.mxu0 0
      %638 = vmatpush1.bf16.msra.mxu0 0
      %639 = vmatprep.subr.bf16.mxu0 0
      %640 = vmatpush1.bf16.msra.mxu0 %v623
      %641 = vmatprep.subr.bf16.mxu0 0
      %642 = vmatpush2.bf16.msra.mxu0 0
      %643 = vmatprep.subr.bf16.mxu0 0
      %644 = vmatpush2.bf16.msra.mxu0 0
      %645 = vmatprep.subr.bf16.mxu0 0
      %646 = vmatpush2.bf16.msra.mxu0 0
      %647 = vmatprep.subr.bf16.mxu0 0
      %648 = vmatpush2.bf16.msra.mxu0 0
      %649 = vmatprep.subr.bf16.mxu0 0
      %650 = vmatpush2.bf16.msra.mxu0 0
      %651 = vmatprep.subr.bf16.mxu0 0
      %652 = vmatpush2.bf16.msra.mxu0 0
      %653 = vmatprep.subr.bf16.mxu0 0
      %654 = vmatpush2.bf16.msra.mxu0 0
      %655 = vmatprep.subr.bf16.mxu0 0
      %656 = vmatpush2.bf16.msra.mxu0 0
      %657 = vmatprep.mubr.bf16.mxu0 0
      %658 = vmatmul.mubr.bf16.gmra.mxu0 %v619
      %v659 = vpop.f32.mrf.mxu0
      %v660 = vadd.f32 0.0, %v659
      %v661 = vpop.f32.mrf.mxu0
      %v662 = vpop.f32.mrf.mxu0
      %v663 = vpop.f32.mrf.mxu0
      %664 = vdwg.mxu0
      %v665 = vpack.c.bf16 %v660, %v660
      %vm666 = vcmask 60416
      %667 = vst.msk [vmem:[#allocation2] sm:$0xf] %vm666, %v665
      %668 = vrot.lane.b32.xlu0 %v553, 120
      %v669 = vpop.permute.xlu0 %668
      %670 = vrot.lane.b32.xlu0 %v553, 88
      %v671 = vpop.permute.xlu0 %670
      %v673 = vsel %vm557, %v669, 0
      %v676 = vsel %vm557, %v671, 0
      %678 = vmatprep.subr.bf16.mxu0 0
      %679 = vmatpush1.bf16.xpose.msra.mxu0 0
      %680 = vmatprep.subr.bf16.mxu0 0
      %681 = vmatpush1.bf16.xpose.msra.mxu0 0
      %682 = vmatprep.subr.bf16.mxu0 0
      %683 = vmatpush1.bf16.xpose.msra.mxu0 0
      %684 = vmatprep.subr.bf16.mxu0 0
      %685 = vmatpush1.bf16.xpose.msra.mxu0 0
      %686 = vmatprep.subr.bf16.mxu0 0
      %687 = vmatpush1.bf16.xpose.msra.mxu0 0
      %688 = vmatprep.subr.bf16.mxu0 0
      %689 = vmatpush1.bf16.xpose.msra.mxu0 0
      %690 = vmatprep.subr.bf16.mxu0 0
      %691 = vmatpush1.bf16.xpose.msra.mxu0 0
      %692 = vmatprep.subr.bf16.mxu0 0
      %693 = vmatpush1.bf16.xpose.msra.mxu0 %v676
      %694 = vmatprep.subr.bf16.mxu0 0
      %695 = vmatpush2.bf16.xpose.msra.mxu0 0
      %696 = vmatprep.subr.bf16.mxu0 0
      %697 = vmatpush2.bf16.xpose.msra.mxu0 0
      %698 = vmatprep.subr.bf16.mxu0 0
      %699 = vmatpush2.bf16.xpose.msra.mxu0 0
      %700 = vmatprep.subr.bf16.mxu0 0
      %701 = vmatpush2.bf16.xpose.msra.mxu0 0
      %702 = vmatprep.subr.bf16.mxu0 0
      %703 = vmatpush2.bf16.xpose.msra.mxu0 0
      %704 = vmatprep.subr.bf16.mxu0 0
      %705 = vmatpush2.bf16.xpose.msra.mxu0 0
      %706 = vmatprep.subr.bf16.mxu0 0
      %707 = vmatpush2.bf16.xpose.msra.mxu0 0
      %708 = vmatprep.subr.bf16.mxu0 0
      %709 = vmatpush2.bf16.xpose.msra.mxu0 0
      %710 = vmatprep.mubr.bf16.mxu0 0
      %711 = vmatmul.mubr.bf16.gmra.mxu0 %v673
      %v712 = vpop.f32.mrf.mxu0
      %v713 = vadd.f32 %v551, %v712
      %v714 = vpop.f32.mrf.mxu0
      %v715 = vpop.f32.mrf.mxu0
      %v716 = vpop.f32.mrf.mxu0
      %717 = vdwg.mxu0
      %v718 = vsel %vm557, %v713, -inf
      %719 = vmax.xlane.f32.xlu0 %v718
      %v720 = vpop.xlane.xlu0 %719
      %v721 = vsub.f32 %v713, %v720
      %v722 = vmul.f32 %v721, 1.442695
      %v723 = vpow.pop %v722
      %v724 = vsel %vm557, %v723, 0.0
      %725 = vadd.xlane.f32.xlu0 %v724
      %v726 = vpop.xlane.xlu0 %725
      %v727 = vrcp.pop %v726
      %v728 = vmul.f32 %v723, %v727
      %v729 = vpack.c.bf16 %v728, %v728
      %730 = vrot.lane.b32.xlu0 %v553, 56
      %v731 = vpop.permute.xlu0 %730
      %v733 = vsel %vm557, %v729, 0
      %v736 = vsel %vm621, %v731, 0
      %738 = vmatprep.subr.bf16.mxu0 0
      %739 = vmatpush1.bf16.msra.mxu0 0
      %740 = vmatprep.subr.bf16.mxu0 0
      %741 = vmatpush1.bf16.msra.mxu0 0
      %742 = vmatprep.subr.bf16.mxu0 0
      %743 = vmatpush1.bf16.msra.mxu0 0
      %744 = vmatprep.subr.bf16.mxu0 0
      %745 = vmatpush1.bf16.msra.mxu0 0
      %746 = vmatprep.subr.bf16.mxu0 0
      %747 = vmatpush1.bf16.msra.mxu0 0
      %748 = vmatprep.subr.bf16.mxu0 0
      %749 = vmatpush1.bf16.msra.mxu0 0
      %750 = vmatprep.subr.bf16.mxu0 0
      %751 = vmatpush1.bf16.msra.mxu0 0
      %752 = vmatprep.subr.bf16.mxu0 0
      %753 = vmatpush1.bf16.msra.mxu0 %v736
      %754 = vmatprep.subr.bf16.mxu0 0
      %755 = vmatpush2.bf16.msra.mxu0 0
      %756 = vmatprep.subr.bf16.mxu0 0
      %757 = vmatpush2.bf16.msra.mxu0 0
      %758 = vmatprep.subr.bf16.mxu0 0
      %759 = vmatpush2.bf16.msra.mxu0 0
      %760 = vmatprep.subr.bf16.mxu0 0
      %761 = vmatpush2.bf16.msra.mxu0 0
      %762 = vmatprep.subr.bf16.mxu0 0
      %763 = vmatpush2.bf16.msra.mxu0 0
      %764 = vmatprep.subr.bf16.mxu0 0
      %765 = vmatpush2.bf16.msra.mxu0 0
      %766 = vmatprep.subr.bf16.mxu0 0
      %767 = vmatpush2.bf16.msra.mxu0 0
      %768 = vmatprep.subr.bf16.mxu0 0
      %769 = vmatpush2.bf16.msra.mxu0 0
      %770 = vmatprep.mubr.bf16.mxu0 0
      %771 = vmatmul.mubr.bf16.gmra.mxu0 %v733
      %v772 = vpop.f32.mrf.mxu0
      %v773 = vadd.f32 0.0, %v772
      %v774 = vpop.f32.mrf.mxu0
      %v775 = vpop.f32.mrf.mxu0
      %v776 = vpop.f32.mrf.mxu0
      %777 = vdwg.mxu0
      %v778 = vpack.c.bf16 %v773, %v773
      %v780 = vunpack.c.l.b16 %v778
      %v781 = vpack.c.b16 %v780, %v780
      %782 = vrot.lane.b32.xlu0 %v781, 8
      %v783 = vpop.permute.xlu0 %782
      %vm785 = vcmask 126016
      %786 = vst.msk [vmem:[#allocation2] sm:$0xf] %vm785, %v783
      %787 = vrot.lane.b32.xlu0 %v553, 112
      %v788 = vpop.permute.xlu0 %787
      %789 = vrot.lane.b32.xlu0 %v553, 80
      %v790 = vpop.permute.xlu0 %789
      %v792 = vsel %vm557, %v788, 0
      %v795 = vsel %vm557, %v790, 0
      %797 = vmatprep.subr.bf16.mxu0 0
      %798 = vmatpush1.bf16.xpose.msra.mxu0 0
      %799 = vmatprep.subr.bf16.mxu0 0
      %800 = vmatpush1.bf16.xpose.msra.mxu0 0
      %801 = vmatprep.subr.bf16.mxu0 0
      %802 = vmatpush1.bf16.xpose.msra.mxu0 0
      %803 = vmatprep.subr.bf16.mxu0 0
      %804 = vmatpush1.bf16.xpose.msra.mxu0 0
      %805 = vmatprep.subr.bf16.mxu0 0
      %806 = vmatpush1.bf16.xpose.msra.mxu0 0
      %807 = vmatprep.subr.bf16.mxu0 0
      %808 = vmatpush1.bf16.xpose.msra.mxu0 0
      %809 = vmatprep.subr.bf16.mxu0 0
      %810 = vmatpush1.bf16.xpose.msra.mxu0 0
      %811 = vmatprep.subr.bf16.mxu0 0
      %812 = vmatpush1.bf16.xpose.msra.mxu0 %v795
      %813 = vmatprep.subr.bf16.mxu0 0
      %814 = vmatpush2.bf16.xpose.msra.mxu0 0
      %815 = vmatprep.subr.bf16.mxu0 0
      %816 = vmatpush2.bf16.xpose.msra.mxu0 0
      %817 = vmatprep.subr.bf16.mxu0 0
      %818 = vmatpush2.bf16.xpose.msra.mxu0 0
      %819 = vmatprep.subr.bf16.mxu0 0
      %820 = vmatpush2.bf16.xpose.msra.mxu0 0
      %821 = vmatprep.subr.bf16.mxu0 0
      %822 = vmatpush2.bf16.xpose.msra.mxu0 0
      %823 = vmatprep.subr.bf16.mxu0 0
      %824 = vmatpush2.bf16.xpose.msra.mxu0 0
      %825 = vmatprep.subr.bf16.mxu0 0
      %826 = vmatpush2.bf16.xpose.msra.mxu0 0
      %827 = vmatprep.subr.bf16.mxu0 0
      %828 = vmatpush2.bf16.xpose.msra.mxu0 0
      %829 = vmatprep.mubr.bf16.mxu0 0
      %830 = vmatmul.mubr.bf16.gmra.mxu0 %v792
      %v831 = vpop.f32.mrf.mxu0
      %v832 = vadd.f32 %v551, %v831
      %v833 = vpop.f32.mrf.mxu0
      %v834 = vpop.f32.mrf.mxu0
      %v835 = vpop.f32.mrf.mxu0
      %836 = vdwg.mxu0
      %v837 = vsel %vm557, %v832, -inf
      %838 = vmax.xlane.f32.xlu0 %v837
      %v839 = vpop.xlane.xlu0 %838
      %v840 = vsub.f32 %v832, %v839
      %v841 = vmul.f32 %v840, 1.442695
      %v842 = vpow.pop %v841
      %v843 = vsel %vm557, %v842, 0.0
      %844 = vadd.xlane.f32.xlu0 %v843
      %v845 = vpop.xlane.xlu0 %844
      %v846 = vrcp.pop %v845
      %v847 = vmul.f32 %v842, %v846
      %v848 = vpack.c.bf16 %v847, %v847
      %849 = vrot.lane.b32.xlu0 %v553, 48
      %v850 = vpop.permute.xlu0 %849
      %v852 = vsel %vm557, %v848, 0
      %v855 = vsel %vm621, %v850, 0
      %857 = vmatprep.subr.bf16.mxu0 0
      %858 = vmatpush1.bf16.msra.mxu0 0
      %859 = vmatprep.subr.bf16.mxu0 0
      %860 = vmatpush1.bf16.msra.mxu0 0
      %861 = vmatprep.subr.bf16.mxu0 0
      %862 = vmatpush1.bf16.msra.mxu0 0
      %863 = vmatprep.subr.bf16.mxu0 0
      %864 = vmatpush1.bf16.msra.mxu0 0
      %865 = vmatprep.subr.bf16.mxu0 0
      %866 = vmatpush1.bf16.msra.mxu0 0
      %867 = vmatprep.subr.bf16.mxu0 0
      %868 = vmatpush1.bf16.msra.mxu0 0
      %869 = vmatprep.subr.bf16.mxu0 0
      %870 = vmatpush1.bf16.msra.mxu0 0
      %871 = vmatprep.subr.bf16.mxu0 0
      %872 = vmatpush1.bf16.msra.mxu0 %v855
      %873 = vmatprep.subr.bf16.mxu0 0
      %874 = vmatpush2.bf16.msra.mxu0 0
      %875 = vmatprep.subr.bf16.mxu0 0
      %876 = vmatpush2.bf16.msra.mxu0 0
      %877 = vmatprep.subr.bf16.mxu0 0
      %878 = vmatpush2.bf16.msra.mxu0 0
      %879 = vmatprep.subr.bf16.mxu0 0
      %880 = vmatpush2.bf16.msra.mxu0 0
      %881 = vmatprep.subr.bf16.mxu0 0
      %882 = vmatpush2.bf16.msra.mxu0 0
      %883 = vmatprep.subr.bf16.mxu0 0
      %884 = vmatpush2.bf16.msra.mxu0 0
      %885 = vmatprep.subr.bf16.mxu0 0
      %886 = vmatpush2.bf16.msra.mxu0 0
      %887 = vmatprep.subr.bf16.mxu0 0
      %888 = vmatpush2.bf16.msra.mxu0 0
      %889 = vmatprep.mubr.bf16.mxu0 0
      %890 = vmatmul.mubr.bf16.gmra.mxu0 %v852
      %v891 = vpop.f32.mrf.mxu0
      %v892 = vadd.f32 0.0, %v891
      %v893 = vpop.f32.mrf.mxu0
      %v894 = vpop.f32.mrf.mxu0
      %v895 = vpop.f32.mrf.mxu0
      %896 = vdwg.mxu0
      %v897 = vpack.c.bf16 %v892, %v892
      %v899 = vunpack.c.l.b16 %v897
      %v900 = vpack.c.b16 %v899, %v899
      %901 = vrot.lane.b32.xlu0 %v900, 16
      %v902 = vpop.permute.xlu0 %901
      %vm904 = vcmask 191616
      %905 = vst.msk [vmem:[#allocation2] sm:$0xf] %vm904, %v902
      %906 = vrot.lane.b32.xlu0 %v553, 104
      %v907 = vpop.permute.xlu0 %906
      %908 = vrot.lane.b32.xlu0 %v553, 72
      %v909 = vpop.permute.xlu0 %908
      %v911 = vsel %vm557, %v907, 0
      %v914 = vsel %vm557, %v909, 0
      %916 = vmatprep.subr.bf16.mxu0 0
      %917 = vmatpush1.bf16.xpose.msra.mxu0 0
      %918 = vmatprep.subr.bf16.mxu0 0
      %919 = vmatpush1.bf16.xpose.msra.mxu0 0
      %920 = vmatprep.subr.bf16.mxu0 0
      %921 = vmatpush1.bf16.xpose.msra.mxu0 0
      %922 = vmatprep.subr.bf16.mxu0 0
      %923 = vmatpush1.bf16.xpose.msra.mxu0 0
      %924 = vmatprep.subr.bf16.mxu0 0
      %925 = vmatpush1.bf16.xpose.msra.mxu0 0
      %926 = vmatprep.subr.bf16.mxu0 0
      %927 = vmatpush1.bf16.xpose.msra.mxu0 0
      %928 = vmatprep.subr.bf16.mxu0 0
      %929 = vmatpush1.bf16.xpose.msra.mxu0 0
      %930 = vmatprep.subr.bf16.mxu0 0
      %931 = vmatpush1.bf16.xpose.msra.mxu0 %v914
      %932 = vmatprep.subr.bf16.mxu0 0
      %933 = vmatpush2.bf16.xpose.msra.mxu0 0
      %934 = vmatprep.subr.bf16.mxu0 0
      %935 = vmatpush2.bf16.xpose.msra.mxu0 0
      %936 = vmatprep.subr.bf16.mxu0 0
      %937 = vmatpush2.bf16.xpose.msra.mxu0 0
      %938 = vmatprep.subr.bf16.mxu0 0
      %939 = vmatpush2.bf16.xpose.msra.mxu0 0
      %940 = vmatprep.subr.bf16.mxu0 0
      %941 = vmatpush2.bf16.xpose.msra.mxu0 0
      %942 = vmatprep.subr.bf16.mxu0 0
      %943 = vmatpush2.bf16.xpose.msra.mxu0 0
      %944 = vmatprep.subr.bf16.mxu0 0
      %945 = vmatpush2.bf16.xpose.msra.mxu0 0
      %946 = vmatprep.subr.bf16.mxu0 0
      %947 = vmatpush2.bf16.xpose.msra.mxu0 0
      %948 = vmatprep.mubr.bf16.mxu0 0
      %949 = vmatmul.mubr.bf16.gmra.mxu0 %v911
      %v950 = vpop.f32.mrf.mxu0
      %v951 = vadd.f32 %v551, %v950
      %v952 = vpop.f32.mrf.mxu0
      %v953 = vpop.f32.mrf.mxu0
      %v954 = vpop.f32.mrf.mxu0
      %955 = vdwg.mxu0
      %v956 = vsel %vm557, %v951, -inf
      %957 = vmax.xlane.f32.xlu0 %v956
      %v958 = vpop.xlane.xlu0 %957
      %v959 = vsub.f32 %v951, %v958
      %v960 = vmul.f32 %v959, 1.442695
      %v961 = vpow.pop %v960
      %v962 = vsel %vm557, %v961, 0.0
      %963 = vadd.xlane.f32.xlu0 %v962
      %v964 = vpop.xlane.xlu0 %963
      %v965 = vrcp.pop %v964
      %v966 = vmul.f32 %v961, %v965
      %v967 = vpack.c.bf16 %v966, %v966
      %968 = vrot.lane.b32.xlu0 %v553, 40
      %v969 = vpop.permute.xlu0 %968
      %v971 = vsel %vm557, %v967, 0
      %v974 = vsel %vm621, %v969, 0
      %976 = vmatprep.subr.bf16.mxu0 0
      %977 = vmatpush1.bf16.msra.mxu0 0
      %978 = vmatprep.subr.bf16.mxu0 0
      %979 = vmatpush1.bf16.msra.mxu0 0
      %980 = vmatprep.subr.bf16.mxu0 0
      %981 = vmatpush1.bf16.msra.mxu0 0
      %982 = vmatprep.subr.bf16.mxu0 0
      %983 = vmatpush1.bf16.msra.mxu0 0
      %984 = vmatprep.subr.bf16.mxu0 0
      %985 = vmatpush1.bf16.msra.mxu0 0
      %986 = vmatprep.subr.bf16.mxu0 0
      %987 = vmatpush1.bf16.msra.mxu0 0
      %988 = vmatprep.subr.bf16.mxu0 0
      %989 = vmatpush1.bf16.msra.mxu0 0
      %990 = vmatprep.subr.bf16.mxu0 0
      %991 = vmatpush1.bf16.msra.mxu0 %v974
      %992 = vmatprep.subr.bf16.mxu0 0
      %993 = vmatpush2.bf16.msra.mxu0 0
      %994 = vmatprep.subr.bf16.mxu0 0
      %995 = vmatpush2.bf16.msra.mxu0 0
      %996 = vmatprep.subr.bf16.mxu0 0
      %997 = vmatpush2.bf16.msra.mxu0 0
      %998 = vmatprep.subr.bf16.mxu0 0
      %999 = vmatpush2.bf16.msra.mxu0 0
      %1000 = vmatprep.subr.bf16.mxu0 0
      %1001 = vmatpush2.bf16.msra.mxu0 0
      %1002 = vmatprep.subr.bf16.mxu0 0
      %1003 = vmatpush2.bf16.msra.mxu0 0
      %1004 = vmatprep.subr.bf16.mxu0 0
      %1005 = vmatpush2.bf16.msra.mxu0 0
      %1006 = vmatprep.subr.bf16.mxu0 0
      %1007 = vmatpush2.bf16.msra.mxu0 0
      %1008 = vmatprep.mubr.bf16.mxu0 0
      %1009 = vmatmul.mubr.bf16.gmra.mxu0 %v971
      %v1010 = vpop.f32.mrf.mxu0
      %v1011 = vadd.f32 0.0, %v1010
      %v1012 = vpop.f32.mrf.mxu0
      %v1013 = vpop.f32.mrf.mxu0
      %v1014 = vpop.f32.mrf.mxu0
      %1015 = vdwg.mxu0
      %v1016 = vpack.c.bf16 %v1011, %v1011
      %v1018 = vunpack.c.l.b16 %v1016
      %v1019 = vpack.c.b16 %v1018, %v1018
      %1020 = vrot.lane.b32.xlu0 %v1019, 24
      %v1021 = vpop.permute.xlu0 %1020
      %vm1023 = vcmask 257216
      %1024 = vst.msk [vmem:[#allocation2] sm:$0xf] %vm1023, %v1021
      %v1025 = vld [vmem:[#allocation2] sm:$0xf]
      %v1026 = vld [vmem:[%s4] sm:$0xf]
      %v1027 = vld [vmem:[%s4 + $0x4] sm:$0xf]
      %v1028 = vld [vmem:[%s4 + $0x8] sm:$0xf]
      %v1029 = vld [vmem:[%s4 + $0xc] sm:$0xf]
      %v1030 = vld [vmem:[%s5] sm:$0x1]
      %v1032 = vlaneseq
      %v1033 = vshrl.u32 %v1032, 7
      %v1034 = vsub.s32 0, %v1033
      %v1035 = vrot.slane %v1030, %v1034
      %v1041 = vunpack.c.l.b16 %v1026
      %v1042 = vunpack.c.l.b16 %v1027
      %v1043 = vunpack.c.l.b16 %v1028
      %v1044 = vunpack.c.l.b16 %v1029
      %v1045 = vpack.c.b16 %v1042, %v1041
      %v1046 = vpack.c.b16 %v1044, %v1043
      %v1050 = vsel %vm502, %v1025, 0
      %1052 = vmatprep.subr.bf16.mxu0 0
      %1053 = vmatpush1.bf16.msra.mxu0 0
      %1054 = vmatprep.subr.bf16.mxu0 0
      %1055 = vmatpush1.bf16.msra.mxu0 0
      %1056 = vmatprep.subr.bf16.mxu0 0
      %1057 = vmatpush1.bf16.msra.mxu0 0
      %1058 = vmatprep.subr.bf16.mxu0 0
      %1059 = vmatpush1.bf16.msra.mxu0 0
      %1060 = vmatprep.subr.bf16.mxu0 0
      %1061 = vmatpush1.bf16.msra.mxu0 0
      %1062 = vmatprep.subr.bf16.mxu0 0
      %1063 = vmatpush1.bf16.msra.mxu0 0
      %1064 = vmatprep.subr.bf16.mxu0 0
      %1065 = vmatpush1.bf16.msra.mxu0 %v1046
      %1066 = vmatprep.subr.bf16.mxu0 0
      %1067 = vmatpush1.bf16.msra.mxu0 %v1045
      %1068 = vmatprep.subr.bf16.mxu0 0
      %1069 = vmatpush2.bf16.msra.mxu0 0
      %1070 = vmatprep.subr.bf16.mxu0 0
      %1071 = vmatpush2.bf16.msra.mxu0 0
      %1072 = vmatprep.subr.bf16.mxu0 0
      %1073 = vmatpush2.bf16.msra.mxu0 0
      %1074 = vmatprep.subr.bf16.mxu0 0
      %1075 = vmatpush2.bf16.msra.mxu0 0
      %1076 = vmatprep.subr.bf16.mxu0 0
      %1077 = vmatpush2.bf16.msra.mxu0 0
      %1078 = vmatprep.subr.bf16.mxu0 0
      %1079 = vmatpush2.bf16.msra.mxu0 0
      %1080 = vmatprep.subr.bf16.mxu0 0
      %1081 = vmatpush2.bf16.msra.mxu0 0
      %1082 = vmatprep.subr.bf16.mxu0 0
      %1083 = vmatpush2.bf16.msra.mxu0 0
      %1084 = vmatprep.mubr.bf16.mxu0 0
      %1085 = vmatmul.mubr.bf16.gmra.mxu0 %v1050
      %v1086 = vpop.f32.mrf.mxu0
      %v1087 = vadd.f32 %v1035, %v1086
      %v1088 = vpop.f32.mrf.mxu0
      %v1089 = vpop.f32.mrf.mxu0
      %v1090 = vpop.f32.mrf.mxu0
      %1091 = vdwg.mxu0
      %v1092 = vunpack.c.l.bf16 %v478
      %v1093 = vadd.f32 %v1087, %v1092
      %v1094 = vld [vmem:[%s6] sm:$0x1]
      %v1095 = vld [vmem:[%s7] sm:$0x1]
      %v1096 = vsel %vm502, %v1093, 0.0
      %1097 = vadd.xlane.f32.xlu0 %v1096
      %v1098 = vpop.xlane.xlu0 %1097
      %v1099 = vrcp.pop 32.0
      %v1100 = vmul.f32 %v1098, %v1099
      %v1101 = vsub.f32 %v1093, %v1100
      %v1102 = vmul.f32 %v1101, %v1101
      %v1103 = vsel %vm502, %v1102, 0.0
      %1104 = vadd.xlane.f32.xlu0 %v1103
      %v1105 = vpop.xlane.xlu0 %1104
      %v1106 = vmul.f32 %v1105, %v1099
      %v1107 = vadd.f32 %v1106, 1e-12
      %v1108 = vrsqrt.pop %v1107
      %v1109 = vmul.f32 %v1101, %v1108
      %v1111 = vlaneseq
      %v1112 = vshrl.u32 %v1111, 7
      %v1113 = vsub.s32 0, %v1112
      %v1114 = vrot.slane %v1094, %v1113
      %v1116 = vmul.f32 %v1109, %v1114
      %v1118 = vlaneseq
      %v1119 = vshrl.u32 %v1118, 7
      %v1120 = vsub.s32 0, %v1119
      %v1121 = vrot.slane %v1095, %v1120
      %v1123 = vadd.f32 %v1116, %v1121
      %v1124 = vpack.c.bf16 %v1123, %v1123
      %v1125 = vld [vmem:[%s8] sm:$0xf]
      %v1126 = vld [vmem:[%s8 + $0x4] sm:$0xf]
      %v1127 = vld [vmem:[%s8 + $0x8] sm:$0xf]
      %v1128 = vld [vmem:[%s8 + $0xc] sm:$0xf]
      %v1129 = vld [vmem:[%s9] sm:$0x1]
      %v1131 = vlaneseq
      %v1132 = vshrl.u32 %v1131, 7
      %v1133 = vsub.s32 0, %v1132
      %v1134 = vrot.slane %v1129, %v1133
      %v1140 = vunpack.c.l.b16 %v1125
      %v1141 = vunpack.c.l.b16 %v1126
      %v1142 = vunpack.c.l.b16 %v1127
      %v1143 = vunpack.c.l.b16 %v1128
      %v1144 = vpack.c.b16 %v1141, %v1140
      %v1145 = vpack.c.b16 %v1143, %v1142
      %v1149 = vsel %vm502, %v1124, 0
      %1151 = vmatprep.subr.bf16.mxu0 0
      %1152 = vmatpush1.bf16.msra.mxu0 0
      %1153 = vmatprep.subr.bf16.mxu0 0
      %1154 = vmatpush1.bf16.msra.mxu0 0
      %1155 = vmatprep.subr.bf16.mxu0 0
      %1156 = vmatpush1.bf16.msra.mxu0 0
      %1157 = vmatprep.subr.bf16.mxu0 0
      %1158 = vmatpush1.bf16.msra.mxu0 0
      %1159 = vmatprep.subr.bf16.mxu0 0
      %1160 = vmatpush1.bf16.msra.mxu0 0
      %1161 = vmatprep.subr.bf16.mxu0 0
      %1162 = vmatpush1.bf16.msra.mxu0 0
      %1163 = vmatprep.subr.bf16.mxu0 0
      %1164 = vmatpush1.bf16.msra.mxu0 %v1145
      %1165 = vmatprep.subr.bf16.mxu0 0
      %1166 = vmatpush1.bf16.msra.mxu0 %v1144
      %1167 = vmatprep.subr.bf16.mxu0 0
      %1168 = vmatpush2.bf16.msra.mxu0 0
      %1169 = vmatprep.subr.bf16.mxu0 0
      %1170 = vmatpush2.bf16.msra.mxu0 0
      %1171 = vmatprep.subr.bf16.mxu0 0
      %1172 = vmatpush2.bf16.msra.mxu0 0
      %1173 = vmatprep.subr.bf16.mxu0 0
      %1174 = vmatpush2.bf16.msra.mxu0 0
      %1175 = vmatprep.subr.bf16.mxu0 0
      %1176 = vmatpush2.bf16.msra.mxu0 0
      %1177 = vmatprep.subr.bf16.mxu0 0
      %1178 = vmatpush2.bf16.msra.mxu0 0
      %1179 = vmatprep.subr.bf16.mxu0 0
      %1180 = vmatpush2.bf16.msra.mxu0 0
      %1181 = vmatprep.subr.bf16.mxu0 0
      %1182 = vmatpush2.bf16.msra.mxu0 0
      %1183 = vmatprep.mubr.bf16.mxu0 0
      %1184 = vmatmul.mubr.bf16.gmra.mxu0 %v1149
      %v1185 = vpop.f32.mrf.mxu0
      %v1186 = vadd.f32 %v1134, %v1185
      %v1187 = vpop.f32.mrf.mxu0
      %v1188 = vpop.f32.mrf.mxu0
      %v1189 = vpop.f32.mrf.mxu0
      %1190 = vdwg.mxu0
      %v1191 = vmul.f32 %v1186, %v1186
      %v1192 = vmul.f32 %v1186, %v1191
      %v1193 = vmul.f32 %v1192, 0.044715
      %v1194 = vadd.f32 %v1186, %v1193
      %v1195 = vmul.f32 %v1194, 0.7978846
      %v1196 = vtanh.pop %v1195
      %v1197 = vadd.f32 %v1196, 1.0
      %v1198 = vmul.f32 %v1197, 0.5
      %v1199 = vmul.f32 %v1186, %v1198
      %v1200 = vpack.c.bf16 %v1199, %v1199
      %v1201 = vld [vmem:[%s10] sm:$0xf]
      %v1202 = vld [vmem:[%s10 + $0x4] sm:$0xf]
      %v1203 = vld [vmem:[%s10 + $0x8] sm:$0xf]
      %v1204 = vld [vmem:[%s10 + $0xc] sm:$0xf]
      %v1205 = vld [vmem:[%s10 + $0x10] sm:$0xf]
      %v1206 = vld [vmem:[%s10 + $0x14] sm:$0xf]
      %v1207 = vld [vmem:[%s10 + $0x18] sm:$0xf]
      %v1208 = vld [vmem:[%s10 + $0x1c] sm:$0xf]
      %v1209 = vld [vmem:[%s11] sm:$0x1]
      %v1211 = vlaneseq
      %v1212 = vshrl.u32 %v1211, 7
      %v1213 = vsub.s32 0, %v1212
      %v1214 = vrot.slane %v1209, %v1213
      %v1224 = vunpack.c.l.b16 %v1201
      %v1225 = vunpack.c.l.b16 %v1202
      %v1226 = vunpack.c.l.b16 %v1203
      %v1227 = vunpack.c.l.b16 %v1204
      %v1228 = vunpack.c.l.b16 %v1205
      %v1229 = vunpack.c.l.b16 %v1206
      %v1230 = vunpack.c.l.b16 %v1207
      %v1231 = vunpack.c.l.b16 %v1208
      %v1232 = vpack.c.b16 %v1225, %v1224
      %v1233 = vpack.c.b16 %v1227, %v1226
      %v1234 = vpack.c.b16 %v1229, %v1228
      %v1235 = vpack.c.b16 %v1231, %v1230
      %vm1240 = vcmask 523264
      %v1242 = vsel %vm1240, %v1200, 0
      %1244 = vmatprep.subr.bf16.mxu0 0
      %1245 = vmatpush1.bf16.msra.mxu0 0
      %1246 = vmatprep.subr.bf16.mxu0 0
      %1247 = vmatpush1.bf16.msra.mxu0 0
      %1248 = vmatprep.subr.bf16.mxu0 0
      %1249 = vmatpush1.bf16.msra.mxu0 0
      %1250 = vmatprep.subr.bf16.mxu0 0
      %1251 = vmatpush1.bf16.msra.mxu0 0
      %1252 = vmatprep.subr.bf16.mxu0 0
      %1253 = vmatpush1.bf16.msra.mxu0 %v1235
      %1254 = vmatprep.subr.bf16.mxu0 0
      %1255 = vmatpush1.bf16.msra.mxu0 %v1234
      %1256 = vmatprep.subr.bf16.mxu0 0
      %1257 = vmatpush1.bf16.msra.mxu0 %v1233
      %1258 = vmatprep.subr.bf16.mxu0 0
      %1259 = vmatpush1.bf16.msra.mxu0 %v1232
      %1260 = vmatprep.subr.bf16.mxu0 0
      %1261 = vmatpush2.bf16.msra.mxu0 0
      %1262 = vmatprep.subr.bf16.mxu0 0
      %1263 = vmatpush2.bf16.msra.mxu0 0
      %1264 = vmatprep.subr.bf16.mxu0 0
      %1265 = vmatpush2.bf16.msra.mxu0 0
      %1266 = vmatprep.subr.bf16.mxu0 0
      %1267 = vmatpush2.bf16.msra.mxu0 0
      %1268 = vmatprep.subr.bf16.mxu0 0
      %1269 = vmatpush2.bf16.msra.mxu0 0
      %1270 = vmatprep.subr.bf16.mxu0 0
      %1271 = vmatpush2.bf16.msra.mxu0 0
      %1272 = vmatprep.subr.bf16.mxu0 0
      %1273 = vmatpush2.bf16.msra.mxu0 0
      %1274 = vmatprep.subr.bf16.mxu0 0
      %1275 = vmatpush2.bf16.msra.mxu0 0
      %1276 = vmatprep.mubr.bf16.mxu0 0
      %1277 = vmatmul.mubr.bf16.gmra.mxu0 %v1242
      %v1278 = vpop.f32.mrf.mxu0
      %v1279 = vadd.f32 %v1214, %v1278
      %v1280 = vpop.f32.mrf.mxu0
      %v1281 = vpop.f32.mrf.mxu0
      %v1282 = vpop.f32.mrf.mxu0
      %1283 = vdwg.mxu0
      %v1284 = vadd.f32 %v1279, %v1123
      %v1285 = vld [vmem:[%s12] sm:$0x1]
      %v1286 = vld [vmem:[%s13] sm:$0x1]
      %v1287 = vsel %vm502, %v1284, 0.0
      %1288 = vadd.xlane.f32.xlu0 %v1287
      %v1289 = vpop.xlane.xlu0 %1288
      %v1290 = vmul.f32 %v1289, %v1099
      %v1291 = vsub.f32 %v1284, %v1290
      %v1292 = vmul.f32 %v1291, %v1291
      %v1293 = vsel %vm502, %v1292, 0.0
      %1294 = vadd.xlane.f32.xlu0 %v1293
      %v1295 = vpop.xlane.xlu0 %1294
      %v1296 = vmul.f32 %v1295, %v1099
      %v1297 = vadd.f32 %v1296, 1e-12
      %v1298 = vrsqrt.pop %v1297
      %v1299 = vmul.f32 %v1291, %v1298
      %v1301 = vlaneseq
      %v1302 = vshrl.u32 %v1301, 7
      %v1303 = vsub.s32 0, %v1302
      %v1304 = vrot.slane %v1285, %v1303
      %v1306 = vmul.f32 %v1299, %v1304
      %v1308 = vlaneseq
      %v1309 = vshrl.u32 %v1308, 7
      %v1310 = vsub.s32 0, %v1309
      %v1311 = vrot.slane %v1286, %v1310
      %v1313 = vadd.f32 %v1306, %v1311
      %v1314 = vpack.c.bf16 %v1313, %v1313
      %vm1315 = vcmask 257024
      %1316 = vst.msk [vmem:[%s476] sm:$0xf] %vm1315, %v1314
      %p1317 = scmp.lt.s32.totalorder %s25, 1
      %s1318 = scalar_select %p1317, %s25, 1
      %s1319 = smul.addr %s1318, 4
      %s1320 = scalar_lea.vmem %s14, %s1319
      // Predicated region
      $region77: #{forward.5} parent=75 // pred_check
        %p1321 = pneg %p347
      $region78: #{forward.5} parent=75 // pred_check_branch
        %1323 = sbr.rel (%p1321) target = $region80
      $region79: #{forward.5} parent=75 // pred_region
        _
      $region80: #{forward.5} parent=75 // pred_fallthru
        _
    $region76: #{forward.5} parent=5 // pred_fallthru
      _
    %p1324 = scmp.le.s32.totalorder 2, %s20
    // Predicated region
    $region81: #{forward.5} parent=5 // pred_check
      %p1325 = pneg %p1324
    $region82: #{forward.5} parent=5 // pred_check_branch
      %1327 = sbr.rel (%p1325) target = $region84
    $region83: #{forward.5} parent=5 // pred_region
      %s1328 = ssub.s32 %s20, 2
      // Predicated region
      $region85: #{forward.5} parent=83 // pred_check
        %p1329 = pneg %p353
      $region86: #{forward.5} parent=83 // pred_check_branch
        %1331 = sbr.rel (%p1329) target = $region88
      $region87: #{forward.5} parent=83 // pred_region
        %p1332 = scmp.lt.s32.totalorder %s26, 1
        %s1333 = scalar_select %p1332, %s26, 1
        %s1334 = smul.addr %s1333, 4
        %s1335 = scalar_lea.vmem %s14, %s1334
      $region88: #{forward.5} parent=83 // pred_fallthru
        _
    $region84: #{forward.5} parent=5 // pred_fallthru
      _
  $region6: #{forward.5} parent=0 // loop_footer
    %s24 = sadd.s32 1, %s20
  $region7: #{forward.5} parent=0 // loop_footer_branch
    %19 = sbr.rel target = $region3
  $region8: #{forward.5} parent=0 // loop_exit
    _

</llo_original>
